<compile_context>
chip_gen: v7x
topology: tpu7x:2x2x1
jax: 0.10.0
libtpu: 0.0.40
codegen_flags: <defaults>
</compile_context>

<pallas_src>
import functools

import jax
import jax.numpy as jnp
from jax.experimental import pallas as pl
from jax.experimental.pallas import tpu as pltpu


def _round_up(x, m):
    return (x + m - 1) // m * m


def _choose_tiles(B, L, max_prod=2048):
    """Pick (tb, tl) so that tb*tl <= max_prod (keeps the two double-buffered
    streamed blocks at ~16 MiB f32 total) while keeping blocks multi-MiB."""
    tb = max(8, min(128, _round_up(B, 8)))
    # v7x megacore: prefer >= 2 parallel batch steps when the batch allows it.
    if tb >= B and B > 8:
        tb = max(8, (_round_up(B, 16) // 2 // 8) * 8)
    if tb * L <= max_prod:
        tl = L                                   # full-L block, single L step
    else:
        tl = max(8, (max_prod // tb) // 8 * 8)   # multiple of 8 sublanes
    return tb, tl


# ---------------------------------------------------------------------------
# Fused kernel: h2att matmul + tanh attention + online softmax + weighted sum
# ---------------------------------------------------------------------------
def attention_kernel(h_ref, wh_ref, bh_ref, att_ref, p_att_ref, wa_ref, ba_ref,
                     out_ref, atth_sc, m_sc, l_sc, acc_sc, *, L, tl):
    # h_ref     : (tb, D)      hidden state tile
    # wh_ref    : (D, A)       h2att weight (resident)
    # bh_ref    : (1, A)       h2att bias (resident)
    # att_ref   : (tb, tl, D)  attention-feature chunk for this (b, l) step
    # p_att_ref : (tb, tl, A)  pre-projected-feature chunk
    # wa_ref    : (1, A)       alpha_net weight (resident)
    # ba_ref    : (1,) SMEM    alpha_net bias (scalar)
    # out_ref   : (tb, D)      output block (resident across the L axis)
    # scratch   : atth (tb,A), m (tb,1), l (tb,1), acc (tb,D), all f32
    li = pl.program_id(1)

    @pl.when(li == 0)
    def _init():
        # Fused Phase 1: the MXU is otherwise idle, this matmul is ~free.
        atth_sc[...] = (
            jnp.dot(h_ref[...], wh_ref[...], preferred_element_type=jnp.float32)
            + bh_ref[...]
        )
        m_sc[...] = jnp.full_like(m_sc, -jnp.inf)
        l_sc[...] = jnp.zeros_like(l_sc)
        acc_sc[...] = jnp.zeros_like(acc_sc)

    att_h = atth_sc[...]                                          # (tb, A)

    # tanh(p_att + att_h) for this L-chunk, then reduce over A (lane axis)
    # with the alpha_net weights -> scores kept as (tb, tl).
    # TODO(synk): on v6e/v7x the broadcast-add + tanh could run in bf16 to
    # halve EUP/VPU work; kept f32 here for parity with the torch module.
    dot = jnp.tanh(p_att_ref[...].astype(jnp.float32) + att_h[:, None, :])
    scores = jnp.sum(dot * wa_ref[...], axis=-1) + ba_ref[0]      # (tb, tl)

    if L % tl:  # static: mask L-padding in the last chunk out of the softmax
        lane = jax.lax.broadcasted_iota(jnp.int32, scores.shape, 1) + li * tl
        scores = jnp.where(lane < L, scores, -1e30)

    # Online softmax update (numerically stable across L chunks).
    m_prev = m_sc[...]
    m_new = jnp.maximum(m_prev, jnp.max(scores, axis=-1, keepdims=True))
    alpha = jnp.exp(m_prev - m_new)                               # (tb, 1)
    p = jnp.exp(scores - m_new)                                   # (tb, tl)
    l_sc[...] = alpha * l_sc[...] + jnp.sum(p, axis=-1, keepdims=True)
    # Weighted sum over the chunk: broadcast-multiply + sublane reduce
    # (deliberately VPU/XLU; a per-batch (1,tl)x(tl,D) matmul is degenerate).
    acc_sc[...] = alpha * acc_sc[...] + jnp.sum(
        p[:, :, None] * att_ref[...].astype(jnp.float32), axis=1)
    m_sc[...] = m_new

    @pl.when(li == pl.num_programs(1) - 1)
    def _finalize():
        # Exact divide for parity with the torch softmax (cost is negligible
        # on a (tb, 1) denominator).
        out_ref[...] = (acc_sc[...] / l_sc[...]).astype(out_ref.dtype)


def attention_forward(h, att_feats, p_att_feats, wh, bh, wa, ba, *,
                      input_dtype=None):
    """input_dtype=jnp.bfloat16 streams the two big operands at half the HBM
    bytes (softmax math / output stay f32); default keeps full f32 parity."""
    B, L, D = att_feats.shape
    A = wh.shape[1]
    assert h.shape == (B, D)
    p_att = p_att_feats.reshape(B, L, A)

    tb, tl = _choose_tiles(B, L)
    Bp = _round_up(max(B, tb), tb)
    Lp = _round_up(L, tl)

    if input_dtype is not None:
        att_feats = att_feats.astype(input_dtype)
        p_att = p_att.astype(input_dtype)

    # Zero-pad batch / L. Padded batch rows stay finite (softmax of tanh(bias)
    # over zero att_feats -> zero output) and are sliced off; padded L
    # positions are masked to -1e30 inside the kernel.  Callers must not pass
    # non-zero garbage in padded buffers.
    pad_b, pad_l = Bp - B, Lp - L
    h_p = jnp.pad(h, ((0, pad_b), (0, 0))) if pad_b else h
    if pad_b or pad_l:
        att_p = jnp.pad(att_feats, ((0, pad_b), (0, pad_l), (0, 0)))
        p_p = jnp.pad(p_att, ((0, pad_b), (0, pad_l), (0, 0)))
    else:
        att_p, p_p = att_feats, p_att

    kernel = functools.partial(attention_kernel, L=L, tl=tl)

    out = pl.pallas_call(
        kernel,
        out_shape=jax.ShapeDtypeStruct((Bp, D), jnp.float32),
        grid_spec=pltpu.PrefetchScalarGridSpec(
            num_scalar_prefetch=0,
            grid=(Bp // tb, Lp // tl),
            in_specs=[
                pl.BlockSpec((tb, D), lambda b, l: (b, 0)),        # h
                pl.BlockSpec((D, A), lambda b, l: (0, 0)),         # W_h2att
                pl.BlockSpec((1, A), lambda b, l: (0, 0)),         # b_h2att
                pl.BlockSpec((tb, tl, D), lambda b, l: (b, l, 0)),  # att_feats
                pl.BlockSpec((tb, tl, A), lambda b, l: (b, l, 0)),  # p_att_feats
                pl.BlockSpec((1, A), lambda b, l: (0, 0)),         # alpha_net w
                pl.BlockSpec(memory_space=pltpu.MemorySpace.SMEM),  # alpha_net b
            ],
            out_specs=pl.BlockSpec((tb, D), lambda b, l: (b, 0)),
            scratch_shapes=[
                pltpu.VMEM((tb, A), jnp.float32),   # att_h (computed at l==0)
                pltpu.VMEM((tb, 1), jnp.float32),   # running max m
                pltpu.VMEM((tb, 1), jnp.float32),   # running denom l
                pltpu.VMEM((tb, D), jnp.float32),   # running numerator acc
            ],
        ),
        compiler_params=pltpu.CompilerParams(
            dimension_semantics=("parallel", "arbitrary"),
            # Raised scoped-VMEM limit (v5e defaults to only 16 MiB); 48 MiB
            # keeps headroom under v7x's 64 MiB physical VMEM.
            vmem_limit_bytes=48 << 20,
        ),
    )(h_p, wh, bh.reshape(1, A), att_p, p_p, wa.reshape(1, A),
      jnp.asarray(ba, jnp.float32).reshape(1))
    return out[:B]


if __name__ == "__main__":
    # Module hardcodes rnn_size = att_hid_size = 512; small batch / att_size.
    B, L, D, A = 2, 8, 512, 512

    key = jax.random.PRNGKey(0)
    k = jax.random.split(key, 7)
    h = jax.random.normal(k[0], (B, D), jnp.float32)
    att_feats = jax.random.normal(k[1], (B, L, D), jnp.float32)
    p_att_feats = jax.random.normal(k[2], (B, L, A), jnp.float32)

    # Deterministic synthetic parameters (nn.Linear(512,512), nn.Linear(512,1)).
    wh = jax.random.normal(k[3], (D, A), jnp.float32) * 0.02   # h2att.weight.T
    bh = jax.random.normal(k[4], (A,), jnp.float32) * 0.02     # h2att.bias
    wa = jax.random.normal(k[5], (A,), jnp.float32) * 0.02     # alpha_net.weight
    ba = jax.random.normal(k[6], (1,), jnp.float32) * 0.02     # alpha_net.bias

    out = attention_forward(h, att_feats, p_att_feats, wh, bh, wa, ba)
    out = jax.block_until_ready(out)

    # Pure-JAX reference of the PyTorch forward.
    att_h_ref = h @ wh + bh
    dot_ref = jnp.tanh(p_att_feats + att_h_ref[:, None, :])
    scores_ref = jnp.einsum("bla,a->bl", dot_ref, wa) + ba[0]
    weight_ref = jax.nn.softmax(scores_ref, axis=-1)
    res_ref = jnp.einsum("bl,bld->bd", weight_ref, att_feats)

    assert out.shape == (B, D)
    err = float(jnp.max(jnp.abs(out - res_ref)))
    assert jnp.allclose(out, res_ref, atol=1e-3, rtol=1e-3), err
    print("KERNEL_OK")
</pallas_src>

<mosaic_0001>
module attributes {stable_mosaic.version = 11 : i64} {
  func.func @attention_kernel(%arg0: i32, %arg1: i32, %arg2: memref<8x512xf32, #tpu.memory_space<vmem>>, %arg3: memref<512x512xf32, #tpu.memory_space<vmem>>, %arg4: memref<1x512xf32, #tpu.memory_space<vmem>>, %arg5: memref<8x8x512xf32, #tpu.memory_space<vmem>>, %arg6: memref<8x8x512xf32, #tpu.memory_space<vmem>>, %arg7: memref<1x512xf32, #tpu.memory_space<vmem>>, %arg8: memref<1xf32, #tpu.memory_space<smem>>, %arg9: memref<8x512xf32, #tpu.memory_space<vmem>>, %arg10: memref<8x512xf32, #tpu.memory_space<vmem>>, %arg11: memref<8x1xf32, #tpu.memory_space<vmem>>, %arg12: memref<8x1xf32, #tpu.memory_space<vmem>>, %arg13: memref<8x512xf32, #tpu.memory_space<vmem>>) attributes {dimension_semantics = [#tpu.dimension_semantics<parallel>, #tpu.dimension_semantics<arbitrary>], iteration_bounds = array<i64: 1, 1>, scalar_prefetch = 0 : i64, scratch_operands = 4 : i64, tpu.core_type = #tpu.core_type<tc>, window_params = [{transform_indices = @transform_0, window_bounds = array<i64: 8, 512>}, {pipeline_mode = #tpu.pipeline_mode<synchronous>, transform_indices = @transform_1, window_bounds = array<i64: 512, 512>}, {pipeline_mode = #tpu.pipeline_mode<synchronous>, transform_indices = @transform_2, window_bounds = array<i64: 1, 512>}, {transform_indices = @transform_3, window_bounds = array<i64: 8, 8, 512>}, {transform_indices = @transform_4, window_bounds = array<i64: 8, 8, 512>}, {pipeline_mode = #tpu.pipeline_mode<synchronous>, transform_indices = @transform_5, window_bounds = array<i64: 1, 512>}, {transform_indices = @transform_6, window_bounds = array<i64: 1>}, {transform_indices = @transform_7, window_bounds = array<i64: 8, 512>}]} {
    %c0_i32 = arith.constant 0 : i32
    %0 = arith.cmpi eq, %arg1, %c0_i32 : i32
    %1 = arith.extui %0 : i1 to i32
    %c0_i32_0 = arith.constant 0 : i32
    %2 = arith.cmpi ne, %1, %c0_i32_0 : i32
    scf.if %2 {
      %c0_28 = arith.constant 0 : index
      %c0_29 = arith.constant 0 : index
      %46 = vector.load %arg2[%c0_28, %c0_29] : memref<8x512xf32, #tpu.memory_space<vmem>>, vector<8x512xf32>
      %c0_30 = arith.constant 0 : index
      %c0_31 = arith.constant 0 : index
      %47 = vector.load %arg3[%c0_30, %c0_31] : memref<512x512xf32, #tpu.memory_space<vmem>>, vector<512x512xf32>
      %cst_32 = arith.constant dense<0.000000e+00> : vector<8x512xf32>
      %48 = tpu.matmul %46, %47, %cst_32 {dimension_numbers = #tpu.dot_dimension_numbers<[1], [0], [0], [1], [0, 0, 1, 1], [], []>} : vector<8x512xf32>, vector<512x512xf32>, vector<8x512xf32> -> vector<8x512xf32>
      %c0_33 = arith.constant 0 : index
      %c0_34 = arith.constant 0 : index
      %49 = vector.load %arg4[%c0_33, %c0_34] : memref<1x512xf32, #tpu.memory_space<vmem>>, vector<1x512xf32>
      %50 = vector.broadcast %49 : vector<1x512xf32> to vector<8x512xf32>
      %51 = arith.addf %48, %50 : vector<8x512xf32>
      %c0_35 = arith.constant 0 : index
      %c0_36 = arith.constant 0 : index
      %52 = vector.load %arg10[%c0_35, %c0_36] : memref<8x512xf32, #tpu.memory_space<vmem>>, vector<8x512xf32>
      tpu.vector_store %arg10[%c0_35, %c0_36], %51 {strides = array<i32>} : memref<8x512xf32, #tpu.memory_space<vmem>>, vector<8x512xf32>,
      %cst_37 = arith.constant 0xFF800000 : f32
      %53 = vector.broadcast %cst_37 : f32 to vector<8x1xf32>
      %c0_38 = arith.constant 0 : index
      %c0_39 = arith.constant 0 : index
      %54 = vector.load %arg11[%c0_38, %c0_39] : memref<8x1xf32, #tpu.memory_space<vmem>>, vector<8x1xf32>
      tpu.vector_store %arg11[%c0_38, %c0_39], %53 {strides = array<i32>} : memref<8x1xf32, #tpu.memory_space<vmem>>, vector<8x1xf32>,
      %cst_40 = arith.constant 0.000000e+00 : f32
      %55 = vector.broadcast %cst_40 : f32 to vector<8x1xf32>
      %c0_41 = arith.constant 0 : index
      %c0_42 = arith.constant 0 : index
      %56 = vector.load %arg12[%c0_41, %c0_42] : memref<8x1xf32, #tpu.memory_space<vmem>>, vector<8x1xf32>
      tpu.vector_store %arg12[%c0_41, %c0_42], %55 {strides = array<i32>} : memref<8x1xf32, #tpu.memory_space<vmem>>, vector<8x1xf32>,
      %cst_43 = arith.constant 0.000000e+00 : f32
      %57 = vector.broadcast %cst_43 : f32 to vector<8x512xf32>
      %c0_44 = arith.constant 0 : index
      %c0_45 = arith.constant 0 : index
      %58 = vector.load %arg13[%c0_44, %c0_45] : memref<8x512xf32, #tpu.memory_space<vmem>>, vector<8x512xf32>
      tpu.vector_store %arg13[%c0_44, %c0_45], %57 {strides = array<i32>} : memref<8x512xf32, #tpu.memory_space<vmem>>, vector<8x512xf32>,
    } else {
    }
    %c0 = arith.constant 0 : index
    %c0_1 = arith.constant 0 : index
    %3 = vector.load %arg10[%c0, %c0_1] : memref<8x512xf32, #tpu.memory_space<vmem>>, vector<8x512xf32>
    %c0_2 = arith.constant 0 : index
    %c0_3 = arith.constant 0 : index
    %c0_4 = arith.constant 0 : index
    %4 = vector.load %arg6[%c0_2, %c0_3, %c0_4] : memref<8x8x512xf32, #tpu.memory_space<vmem>>, vector<8x8x512xf32>
    %5 = vector.shape_cast %3 : vector<8x512xf32> to vector<8x1x512xf32>
    %6 = vector.broadcast %5 : vector<8x1x512xf32> to vector<8x8x512xf32>
    %7 = arith.addf %4, %6 : vector<8x8x512xf32>
    %8 = math.tanh %7 : vector<8x8x512xf32>
    %c0_5 = arith.constant 0 : index
    %c0_6 = arith.constant 0 : index
    %9 = vector.load %arg7[%c0_5, %c0_6] : memref<1x512xf32, #tpu.memory_space<vmem>>, vector<1x512xf32>
    %10 = vector.shape_cast %9 : vector<1x512xf32> to vector<1x1x512xf32>
    %11 = vector.broadcast %10 : vector<1x1x512xf32> to vector<8x8x512xf32>
    %12 = arith.mulf %8, %11 : vector<8x8x512xf32>
    %cst = arith.constant dense<0.000000e+00> : vector<8x8xf32>
    %13 = vector.multi_reduction <add>, %12, %cst [2] : vector<8x8x512xf32> to vector<8x8xf32>
    %c0_7 = arith.constant 0 : index
    %14 = memref.load %arg8[%c0_7] : memref<1xf32, #tpu.memory_space<smem>>
    %15 = vector.broadcast %14 : f32 to vector<8x8xf32>
    %16 = arith.addf %13, %15 : vector<8x8xf32>
    %c0_8 = arith.constant 0 : index
    %c0_9 = arith.constant 0 : index
    %17 = vector.load %arg11[%c0_8, %c0_9] : memref<8x1xf32, #tpu.memory_space<vmem>>, vector<8x1xf32>
    %cst_10 = arith.constant dense<0xFF800000> : vector<8xf32>
    %18 = vector.multi_reduction <maximumf>, %16, %cst_10 [1] : vector<8x8xf32> to vector<8xf32>
    %19 = vector.shape_cast %18 : vector<8xf32> to vector<8x1xf32>
    %20 = arith.maximumf %17, %19 : vector<8x1xf32>
    %21 = arith.subf %17, %20 : vector<8x1xf32>
    %22 = math.exp %21 : vector<8x1xf32>
    %23 = vector.broadcast %20 : vector<8x1xf32> to vector<8x8xf32>
    %24 = arith.subf %16, %23 : vector<8x8xf32>
    %25 = math.exp %24 : vector<8x8xf32>
    %c0_11 = arith.constant 0 : index
    %c0_12 = arith.constant 0 : index
    %26 = vector.load %arg12[%c0_11, %c0_12] : memref<8x1xf32, #tpu.memory_space<vmem>>, vector<8x1xf32>
    %27 = arith.mulf %22, %26 : vector<8x1xf32>
    %cst_13 = arith.constant dense<0.000000e+00> : vector<8xf32>
    %28 = vector.multi_reduction <add>, %25, %cst_13 [1] : vector<8x8xf32> to vector<8xf32>
    %29 = vector.shape_cast %28 : vector<8xf32> to vector<8x1xf32>
    %30 = arith.addf %27, %29 : vector<8x1xf32>
    %c0_14 = arith.constant 0 : index
    %c0_15 = arith.constant 0 : index
    %31 = vector.load %arg12[%c0_14, %c0_15] : memref<8x1xf32, #tpu.memory_space<vmem>>, vector<8x1xf32>
    tpu.vector_store %arg12[%c0_14, %c0_15], %30 {strides = array<i32>} : memref<8x1xf32, #tpu.memory_space<vmem>>, vector<8x1xf32>,
    %c0_16 = arith.constant 0 : index
    %c0_17 = arith.constant 0 : index
    %32 = vector.load %arg13[%c0_16, %c0_17] : memref<8x512xf32, #tpu.memory_space<vmem>>, vector<8x512xf32>
    %33 = vector.broadcast %22 : vector<8x1xf32> to vector<8x512xf32>
    %34 = arith.mulf %33, %32 : vector<8x512xf32>
    %35 = vector.shape_cast %25 : vector<8x8xf32> to vector<8x8x1xf32>
    %c0_18 = arith.constant 0 : index
    %c0_19 = arith.constant 0 : index
    %c0_20 = arith.constant 0 : index
    %36 = vector.load %arg5[%c0_18, %c0_19, %c0_20] : memref<8x8x512xf32, #tpu.memory_space<vmem>>, vector<8x8x512xf32>
    %37 = vector.broadcast %35 : vector<8x8x1xf32> to vector<8x8x512xf32>
    %38 = arith.mulf %37, %36 : vector<8x8x512xf32>
    %cst_21 = arith.constant dense<0.000000e+00> : vector<8x512xf32>
    %39 = vector.multi_reduction <add>, %38, %cst_21 [1] : vector<8x8x512xf32> to vector<8x512xf32>
    %40 = arith.addf %34, %39 : vector<8x512xf32>
    %c0_22 = arith.constant 0 : index
    %c0_23 = arith.constant 0 : index
    %41 = vector.load %arg13[%c0_22, %c0_23] : memref<8x512xf32, #tpu.memory_space<vmem>>, vector<8x512xf32>
    tpu.vector_store %arg13[%c0_22, %c0_23], %40 {strides = array<i32>} : memref<8x512xf32, #tpu.memory_space<vmem>>, vector<8x512xf32>,
    %c0_24 = arith.constant 0 : index
    %c0_25 = arith.constant 0 : index
    %42 = vector.load %arg11[%c0_24, %c0_25] : memref<8x1xf32, #tpu.memory_space<vmem>>, vector<8x1xf32>
    tpu.vector_store %arg11[%c0_24, %c0_25], %20 {strides = array<i32>} : memref<8x1xf32, #tpu.memory_space<vmem>>, vector<8x1xf32>,
    %c0_i32_26 = arith.constant 0 : i32
    %43 = arith.cmpi eq, %arg1, %c0_i32_26 : i32
    %44 = arith.extui %43 : i1 to i32
    %c0_i32_27 = arith.constant 0 : i32
    %45 = arith.cmpi ne, %44, %c0_i32_27 : i32
    scf.if %45 {
      %c0_28 = arith.constant 0 : index
      %c0_29 = arith.constant 0 : index
      %46 = vector.load %arg13[%c0_28, %c0_29] : memref<8x512xf32, #tpu.memory_space<vmem>>, vector<8x512xf32>
      %c0_30 = arith.constant 0 : index
      %c0_31 = arith.constant 0 : index
      %47 = vector.load %arg12[%c0_30, %c0_31] : memref<8x1xf32, #tpu.memory_space<vmem>>, vector<8x1xf32>
      %48 = vector.broadcast %47 : vector<8x1xf32> to vector<8x512xf32>
      %49 = arith.divf %46, %48 : vector<8x512xf32>
      %c0_32 = arith.constant 0 : index
      %c0_33 = arith.constant 0 : index
      %50 = vector.load %arg9[%c0_32, %c0_33] : memref<8x512xf32, #tpu.memory_space<vmem>>, vector<8x512xf32>
      tpu.vector_store %arg9[%c0_32, %c0_33], %49 {strides = array<i32>} : memref<8x512xf32, #tpu.memory_space<vmem>>, vector<8x512xf32>,
    } else {
    }
    return
  }
  func.func @transform_0(%arg0: i32, %arg1: i32) -> (i32, i32) {
    %c0_i32 = arith.constant 0 : i32
    %c0_i32_0 = arith.constant 0 : i32
    return %arg0, %c0_i32 : i32, i32
  }
  func.func @transform_1(%arg0: i32, %arg1: i32) -> (i32, i32) {
    %c0_i32 = arith.constant 0 : i32
    %c0_i32_0 = arith.constant 0 : i32
    %c0_i32_1 = arith.constant 0 : i32
    return %c0_i32, %c0_i32_0 : i32, i32
  }
  func.func @transform_2(%arg0: i32, %arg1: i32) -> (i32, i32) {
    %c0_i32 = arith.constant 0 : i32
    %c0_i32_0 = arith.constant 0 : i32
    %c0_i32_1 = arith.constant 0 : i32
    return %c0_i32, %c0_i32_0 : i32, i32
  }
  func.func @transform_3(%arg0: i32, %arg1: i32) -> (i32, i32, i32) {
    %c0_i32 = arith.constant 0 : i32
    %c0_i32_0 = arith.constant 0 : i32
    return %arg0, %arg1, %c0_i32 : i32, i32, i32
  }
  func.func @transform_4(%arg0: i32, %arg1: i32) -> (i32, i32, i32) {
    %c0_i32 = arith.constant 0 : i32
    %c0_i32_0 = arith.constant 0 : i32
    return %arg0, %arg1, %c0_i32 : i32, i32, i32
  }
  func.func @transform_5(%arg0: i32, %arg1: i32) -> (i32, i32) {
    %c0_i32 = arith.constant 0 : i32
    %c0_i32_0 = arith.constant 0 : i32
    %c0_i32_1 = arith.constant 0 : i32
    return %c0_i32, %c0_i32_0 : i32, i32
  }
  func.func @transform_6(%arg0: i32, %arg1: i32) -> i32 {
    %c0_i32 = arith.constant 0 : i32
    %c0_i32_0 = arith.constant 0 : i32
    return %c0_i32 : i32
  }
  func.func @transform_7(%arg0: i32, %arg1: i32) -> (i32, i32) {
    %c0_i32 = arith.constant 0 : i32
    %c0_i32_0 = arith.constant 0 : i32
    return %arg0, %c0_i32 : i32, i32
  }
}

</mosaic_0001>

<llo_original>
// kernel: tpu_custom_call.1
$region0: #{tpu_custom_call.1}
  #allocation0 [shape = 'u32[]', space=smem, size = 0x4, offset = 0x4, fixed_abs, tag = 'smem constant byte address 0x4 - core index']
  #allocation1 [shape = 'u32[144,128]{1,0:T(1,128)}', space=vmem, size = 0x12000, scoped, tag = 'internal scratch']
  #allocation2 [shape = 'f32[8,512]{1,0:T(8,128)}', space=vmem, size = 0x4000, scoped, tag = 'scratch operand']
  #allocation3 [shape = 'f32[8,1]{1,0:T(8,128)}', space=vmem, size = 0x1000, scoped, tag = 'scratch operand']
  #allocation4 [shape = 'f32[8,1]{1,0:T(8,128)}', space=vmem, size = 0x1000, scoped, tag = 'scratch operand']
  #allocation5 [shape = 'f32[8,512]{1,0:T(8,128)}', space=vmem, size = 0x4000, scoped, tag = 'scratch operand']
  #allocation6 [shape = 'f32[1]{0:T(128)S(6)}', space=smem, size = 0x200, scoped, tag = 'scoped memory for tpu_custom_call.1']
  %s0 = inlined_call_operand.hbm [shape: f32[8,512], index: 0, kind: input, shape index: {}]
  %s1 = inlined_call_operand.hbm [shape: f32[512,512], index: 1, kind: input, shape index: {}]
  %s2 = inlined_call_operand.vmem [shape: f32[1,512], index: 2, kind: input, shape index: {}]
  %s3 = inlined_call_operand.hbm [shape: f32[8,8,512], index: 3, kind: input, shape index: {}]
  %s4 = inlined_call_operand.hbm [shape: f32[8,8,512], index: 4, kind: input, shape index: {}]
  %s5 = inlined_call_operand.vmem [shape: f32[1,512], index: 5, kind: input, shape index: {}]
  %s6 = inlined_call_operand.<no memory space> [shape: f32[1], index: 6, kind: input, shape index: {}]
  %s7 = inlined_call_operand.hbm [shape: f32[8,512], index: 7, kind: output, shape index: {}]
  %s8 = sld [smem:[#allocation0]]
  $region62: #{tpu_custom_call.1} parent=0
    _
  %s10 = ssub.s32 1, %s8
  %s11 = scalar_select 0, %s10, %s8
  %12 = sst [smem:[#allocation6]] %s6
  $region1: #{tpu_custom_call.1} parent=0
    #allocation7 [shape = 'u8[16384]{0}', space=vmem, size = 0x4000, scoped, tag = 'input window, operand 0, single buffered']
    #allocation8 [shape = 's32[1]{0}', space=sflag, size = 0x4, scoped, tag = 'scoped memory for tpu_custom_call.1']
    #allocation9 [shape = 's32[1]{0}', space=sflag, size = 0x4, scoped, tag = 'scoped memory for tpu_custom_call.1']
    #allocation10 [shape = 'u8[1048576]{0}', space=vmem, size = 0x100000, scoped, tag = 'input window, operand 1, single buffered']
    #allocation11 [shape = 's32[1]{0}', space=sflag, size = 0x4, scoped, tag = 'scoped memory for tpu_custom_call.1']
    #allocation12 [shape = 'u8[131072]{0}', space=vmem, size = 0x20000, scoped, tag = 'input window, operand 3, single buffered']
    #allocation13 [shape = 'u8[131072]{0}', space=vmem, size = 0x20000, scoped, tag = 'input window, operand 4, single buffered']
    #allocation14 [shape = 's32[1]{0}', space=sflag, size = 0x4, scoped, tag = 'scoped memory for tpu_custom_call.1']
    #allocation15 [shape = 'u8[16384]{0}', space=vmem, size = 0x4000, scoped, tag = 'output window, operand 0, single buffered']
    %13 = vsyncpa [#allocation8], 0
    %14 = vsyncpa [#allocation11], 0
    %15 = vsyncpa [#allocation14], 0
    %16 = vsyncpa [#allocation9], 0
    // Predicated region
    $region2: #{tpu_custom_call.1} parent=1 // pred_check
      _
    $region3: #{tpu_custom_call.1} parent=1 // pred_check_branch
      %18 = sbr.rel (0) target = $region5
    $region4: #{tpu_custom_call.1} parent=1 // pred_region
      %s20 = ssub.s32 512, 512
      %21 = vsyncadd [#allocation8], %s20
      %s23 = sshll.u32 [#allocation7], 4
      %s24 = int_to_ptr.vmem [resolvable:$true] %s23
      %26 = dma.hbm_to_vmem [thread:$0]  %s0, 512, %s24, [#allocation8]
    $region5: #{tpu_custom_call.1} parent=1 // pred_fallthru
      _
    // Predicated region
    $region6: #{tpu_custom_call.1} parent=1 // pred_check
      _
    $region7: #{tpu_custom_call.1} parent=1 // pred_check_branch
      %28 = sbr.rel (0) target = $region9
    $region8: #{tpu_custom_call.1} parent=1 // pred_region
      %s30 = ssub.s32 32768, 32768
      %31 = vsyncadd [#allocation11], %s30
      %s32 = sshll.u32 [#allocation10], 4
      %s33 = int_to_ptr.vmem [resolvable:$true] %s32
      %38 = dma.hbm_to_vmem [thread:$0]  %s1, 32768, %s33, [#allocation11], 512, 512, 32
    $region9: #{tpu_custom_call.1} parent=1 // pred_fallthru
      _
    // Predicated region
    $region10: #{tpu_custom_call.1} parent=1 // pred_check
      _
    $region11: #{tpu_custom_call.1} parent=1 // pred_check_branch
      %40 = sbr.rel (0) target = $region13
    $region12: #{tpu_custom_call.1} parent=1 // pred_region
      _
    $region13: #{tpu_custom_call.1} parent=1 // pred_fallthru
      _
    // Predicated region
    $region14: #{tpu_custom_call.1} parent=1 // pred_check
      _
    $region15: #{tpu_custom_call.1} parent=1 // pred_check_branch
      %42 = sbr.rel (0) target = $region17
    $region16: #{tpu_custom_call.1} parent=1 // pred_region
      %s44 = ssub.s32 4096, 4096
      %45 = vsyncadd [#allocation11], %s44
      %s46 = sshll.u32 [#allocation12], 4
      %s47 = int_to_ptr.vmem [resolvable:$true] %s46
      %52 = dma.hbm_to_vmem [thread:$0]  %s3, 4096, %s47, [#allocation11], 512, 512, 32
    $region17: #{tpu_custom_call.1} parent=1 // pred_fallthru
      _
    // Predicated region
    $region18: #{tpu_custom_call.1} parent=1 // pred_check
      _
    $region19: #{tpu_custom_call.1} parent=1 // pred_check_branch
      %54 = sbr.rel (0) target = $region21
    $region20: #{tpu_custom_call.1} parent=1 // pred_region
      %s56 = ssub.s32 4096, 4096
      %57 = vsyncadd [#allocation14], %s56
      %s58 = sshll.u32 [#allocation13], 4
      %s59 = int_to_ptr.vmem [resolvable:$true] %s58
      %64 = dma.hbm_to_vmem [thread:$0]  %s4, 4096, %s59, [#allocation14], 512, 512, 32
    $region21: #{tpu_custom_call.1} parent=1 // pred_fallthru
      _
    // Predicated region
    $region22: #{tpu_custom_call.1} parent=1 // pred_check
      _
    $region23: #{tpu_custom_call.1} parent=1 // pred_check_branch
      %66 = sbr.rel (0) target = $region25
    $region24: #{tpu_custom_call.1} parent=1 // pred_region
      _
    $region25: #{tpu_custom_call.1} parent=1 // pred_fallthru
      _
    // Predicated region
    $region26: #{tpu_custom_call.1} parent=1 // pred_check
      _
    $region27: #{tpu_custom_call.1} parent=1 // pred_check_branch
      %68 = sbr.rel (0) target = $region29
    $region28: #{tpu_custom_call.1} parent=1 // pred_region
      _
    $region29: #{tpu_custom_call.1} parent=1 // pred_fallthru
      _
    // Predicated region
    $region30: #{tpu_custom_call.1} parent=1 // pred_check
      _
    $region31: #{tpu_custom_call.1} parent=1 // pred_check_branch
      %70 = sbr.rel (0) target = $region33
    $region32: #{tpu_custom_call.1} parent=1 // pred_region
      %71 = dma.done [#allocation8], 512
    $region33: #{tpu_custom_call.1} parent=1 // pred_fallthru
      _
    // Predicated region
    $region34: #{tpu_custom_call.1} parent=1 // pred_check
      _
    $region35: #{tpu_custom_call.1} parent=1 // pred_check_branch
      %73 = sbr.rel (0) target = $region37
    $region36: #{tpu_custom_call.1} parent=1 // pred_region
      %74 = dma.done [#allocation11], 32768
    $region37: #{tpu_custom_call.1} parent=1 // pred_fallthru
      _
    // Predicated region
    $region38: #{tpu_custom_call.1} parent=1 // pred_check
      _
    $region39: #{tpu_custom_call.1} parent=1 // pred_check_branch
      %76 = sbr.rel (0) target = $region41
    $region40: #{tpu_custom_call.1} parent=1 // pred_region
      %77 = dma.done [#allocation11], 4096
    $region41: #{tpu_custom_call.1} parent=1 // pred_fallthru
      _
    // Predicated region
    $region42: #{tpu_custom_call.1} parent=1 // pred_check
      _
    $region43: #{tpu_custom_call.1} parent=1 // pred_check_branch
      %79 = sbr.rel (0) target = $region45
    $region44: #{tpu_custom_call.1} parent=1 // pred_region
      %80 = dma.done [#allocation14], 4096
    $region45: #{tpu_custom_call.1} parent=1 // pred_fallthru
      _
    %p81 = scmp.eq.s32.totalorder 0, 0
    // Predicated region
    $region46: #{tpu_custom_call.1} parent=1 // pred_check
      %p82 = pneg %p81
    $region47: #{tpu_custom_call.1} parent=1 // pred_check_branch
      %84 = sbr.rel (%p82) target = $region49
    $region48: #{tpu_custom_call.1} parent=1 // pred_region
      %v85 = vld [vmem:[#allocation7] sm:$0xff]
      %v86 = vld [vmem:[#allocation7 + $0x8] sm:$0xff]
      %v87 = vld [vmem:[#allocation7 + $0x10] sm:$0xff]
      %v88 = vld [vmem:[#allocation7 + $0x18] sm:$0xff]
      %v89 = vld [vmem:[#allocation10] sm:$0xff]
      %v90 = vld [vmem:[#allocation10 + $0x8] sm:$0xff]
      %v91 = vld [vmem:[#allocation10 + $0x10] sm:$0xff]
      %v92 = vld [vmem:[#allocation10 + $0x18] sm:$0xff]
      %v93 = vld [vmem:[#allocation10 + $0x20] sm:$0xff]
      %v94 = vld [vmem:[#allocation10 + $0x28] sm:$0xff]
      %v95 = vld [vmem:[#allocation10 + $0x30] sm:$0xff]
      %v96 = vld [vmem:[#allocation10 + $0x38] sm:$0xff]
      %v97 = vld [vmem:[#allocation10 + $0x40] sm:$0xff]
      %v98 = vld [vmem:[#allocation10 + $0x48] sm:$0xff]
      %v99 = vld [vmem:[#allocation10 + $0x50] sm:$0xff]
      %v100 = vld [vmem:[#allocation10 + $0x58] sm:$0xff]
      %v101 = vld [vmem:[#allocation10 + $0x60] sm:$0xff]
      %v102 = vld [vmem:[#allocation10 + $0x68] sm:$0xff]
      %v103 = vld [vmem:[#allocation10 + $0x70] sm:$0xff]
      %v104 = vld [vmem:[#allocation10 + $0x78] sm:$0xff]
      %v105 = vld [vmem:[#allocation10 + $0x80] sm:$0xff]
      %v106 = vld [vmem:[#allocation10 + $0x88] sm:$0xff]
      %v107 = vld [vmem:[#allocation10 + $0x90] sm:$0xff]
      %v108 = vld [vmem:[#allocation10 + $0x98] sm:$0xff]
      %v109 = vld [vmem:[#allocation10 + $0xa0] sm:$0xff]
      %v110 = vld [vmem:[#allocation10 + $0xa8] sm:$0xff]
      %v111 = vld [vmem:[#allocation10 + $0xb0] sm:$0xff]
      %v112 = vld [vmem:[#allocation10 + $0xb8] sm:$0xff]
      %v113 = vld [vmem:[#allocation10 + $0xc0] sm:$0xff]
      %v114 = vld [vmem:[#allocation10 + $0xc8] sm:$0xff]
      %v115 = vld [vmem:[#allocation10 + $0xd0] sm:$0xff]
      %v116 = vld [vmem:[#allocation10 + $0xd8] sm:$0xff]
      %v117 = vld [vmem:[#allocation10 + $0xe0] sm:$0xff]
      %v118 = vld [vmem:[#allocation10 + $0xe8] sm:$0xff]
      %v119 = vld [vmem:[#allocation10 + $0xf0] sm:$0xff]
      %v120 = vld [vmem:[#allocation10 + $0xf8] sm:$0xff]
      %v121 = vld [vmem:[#allocation10 + $0x100] sm:$0xff]
      %v122 = vld [vmem:[#allocation10 + $0x108] sm:$0xff]
      %v123 = vld [vmem:[#allocation10 + $0x110] sm:$0xff]
      %v124 = vld [vmem:[#allocation10 + $0x118] sm:$0xff]
      %v125 = vld [vmem:[#allocation10 + $0x120] sm:$0xff]
      %v126 = vld [vmem:[#allocation10 + $0x128] sm:$0xff]
      %v127 = vld [vmem:[#allocation10 + $0x130] sm:$0xff]
      %v128 = vld [vmem:[#allocation10 + $0x138] sm:$0xff]
      %v129 = vld [vmem:[#allocation10 + $0x140] sm:$0xff]
      %v130 = vld [vmem:[#allocation10 + $0x148] sm:$0xff]
      %v131 = vld [vmem:[#allocation10 + $0x150] sm:$0xff]
      %v132 = vld [vmem:[#allocation10 + $0x158] sm:$0xff]
      %v133 = vld [vmem:[#allocation10 + $0x160] sm:$0xff]
      %v134 = vld [vmem:[#allocation10 + $0x168] sm:$0xff]
      %v135 = vld [vmem:[#allocation10 + $0x170] sm:$0xff]
      %v136 = vld [vmem:[#allocation10 + $0x178] sm:$0xff]
      %v137 = vld [vmem:[#allocation10 + $0x180] sm:$0xff]
      %v138 = vld [vmem:[#allocation10 + $0x188] sm:$0xff]
      %v139 = vld [vmem:[#allocation10 + $0x190] sm:$0xff]
      %v140 = vld [vmem:[#allocation10 + $0x198] sm:$0xff]
      %v141 = vld [vmem:[#allocation10 + $0x1a0] sm:$0xff]
      %v142 = vld [vmem:[#allocation10 + $0x1a8] sm:$0xff]
      %v143 = vld [vmem:[#allocation10 + $0x1b0] sm:$0xff]
      %v144 = vld [vmem:[#allocation10 + $0x1b8] sm:$0xff]
      %v145 = vld [vmem:[#allocation10 + $0x1c0] sm:$0xff]
      %v146 = vld [vmem:[#allocation10 + $0x1c8] sm:$0xff]
      %v147 = vld [vmem:[#allocation10 + $0x1d0] sm:$0xff]
      %v148 = vld [vmem:[#allocation10 + $0x1d8] sm:$0xff]
      %v149 = vld [vmem:[#allocation10 + $0x1e0] sm:$0xff]
      %v150 = vld [vmem:[#allocation10 + $0x1e8] sm:$0xff]
      %v151 = vld [vmem:[#allocation10 + $0x1f0] sm:$0xff]
      %v152 = vld [vmem:[#allocation10 + $0x1f8] sm:$0xff]
      %v153 = vld [vmem:[#allocation10 + $0x200] sm:$0xff]
      %v154 = vld [vmem:[#allocation10 + $0x208] sm:$0xff]
      %v155 = vld [vmem:[#allocation10 + $0x210] sm:$0xff]
      %v156 = vld [vmem:[#allocation10 + $0x218] sm:$0xff]
      %v157 = vld [vmem:[#allocation10 + $0x220] sm:$0xff]
      %v158 = vld [vmem:[#allocation10 + $0x228] sm:$0xff]
      %v159 = vld [vmem:[#allocation10 + $0x230] sm:$0xff]
      %v160 = vld [vmem:[#allocation10 + $0x238] sm:$0xff]
      %v161 = vld [vmem:[#allocation10 + $0x240] sm:$0xff]
      %v162 = vld [vmem:[#allocation10 + $0x248] sm:$0xff]
      %v163 = vld [vmem:[#allocation10 + $0x250] sm:$0xff]
      %v164 = vld [vmem:[#allocation10 + $0x258] sm:$0xff]
      %v165 = vld [vmem:[#allocation10 + $0x260] sm:$0xff]
      %v166 = vld [vmem:[#allocation10 + $0x268] sm:$0xff]
      %v167 = vld [vmem:[#allocation10 + $0x270] sm:$0xff]
      %v168 = vld [vmem:[#allocation10 + $0x278] sm:$0xff]
      %v169 = vld [vmem:[#allocation10 + $0x280] sm:$0xff]
      %v170 = vld [vmem:[#allocation10 + $0x288] sm:$0xff]
      %v171 = vld [vmem:[#allocation10 + $0x290] sm:$0xff]
      %v172 = vld [vmem:[#allocation10 + $0x298] sm:$0xff]
      %v173 = vld [vmem:[#allocation10 + $0x2a0] sm:$0xff]
      %v174 = vld [vmem:[#allocation10 + $0x2a8] sm:$0xff]
      %v175 = vld [vmem:[#allocation10 + $0x2b0] sm:$0xff]
      %v176 = vld [vmem:[#allocation10 + $0x2b8] sm:$0xff]
      %v177 = vld [vmem:[#allocation10 + $0x2c0] sm:$0xff]
      %v178 = vld [vmem:[#allocation10 + $0x2c8] sm:$0xff]
      %v179 = vld [vmem:[#allocation10 + $0x2d0] sm:$0xff]
      %v180 = vld [vmem:[#allocation10 + $0x2d8] sm:$0xff]
      %v181 = vld [vmem:[#allocation10 + $0x2e0] sm:$0xff]
      %v182 = vld [vmem:[#allocation10 + $0x2e8] sm:$0xff]
      %v183 = vld [vmem:[#allocation10 + $0x2f0] sm:$0xff]
      %v184 = vld [vmem:[#allocation10 + $0x2f8] sm:$0xff]
      %v185 = vld [vmem:[#allocation10 + $0x300] sm:$0xff]
      %v186 = vld [vmem:[#allocation10 + $0x308] sm:$0xff]
      %v187 = vld [vmem:[#allocation10 + $0x310] sm:$0xff]
      %v188 = vld [vmem:[#allocation10 + $0x318] sm:$0xff]
      %v189 = vld [vmem:[#allocation10 + $0x320] sm:$0xff]
      %v190 = vld [vmem:[#allocation10 + $0x328] sm:$0xff]
      %v191 = vld [vmem:[#allocation10 + $0x330] sm:$0xff]
      %v192 = vld [vmem:[#allocation10 + $0x338] sm:$0xff]
      %v193 = vld [vmem:[#allocation10 + $0x340] sm:$0xff]
      %v194 = vld [vmem:[#allocation10 + $0x348] sm:$0xff]
      %v195 = vld [vmem:[#allocation10 + $0x350] sm:$0xff]
      %v196 = vld [vmem:[#allocation10 + $0x358] sm:$0xff]
      %v197 = vld [vmem:[#allocation10 + $0x360] sm:$0xff]
      %v198 = vld [vmem:[#allocation10 + $0x368] sm:$0xff]
      %v199 = vld [vmem:[#allocation10 + $0x370] sm:$0xff]
      %v200 = vld [vmem:[#allocation10 + $0x378] sm:$0xff]
      %v201 = vld [vmem:[#allocation10 + $0x380] sm:$0xff]
      %v202 = vld [vmem:[#allocation10 + $0x388] sm:$0xff]
      %v203 = vld [vmem:[#allocation10 + $0x390] sm:$0xff]
      %v204 = vld [vmem:[#allocation10 + $0x398] sm:$0xff]
      %v205 = vld [vmem:[#allocation10 + $0x3a0] sm:$0xff]
      %v206 = vld [vmem:[#allocation10 + $0x3a8] sm:$0xff]
      %v207 = vld [vmem:[#allocation10 + $0x3b0] sm:$0xff]
      %v208 = vld [vmem:[#allocation10 + $0x3b8] sm:$0xff]
      %v209 = vld [vmem:[#allocation10 + $0x3c0] sm:$0xff]
      %v210 = vld [vmem:[#allocation10 + $0x3c8] sm:$0xff]
      %v211 = vld [vmem:[#allocation10 + $0x3d0] sm:$0xff]
      %v212 = vld [vmem:[#allocation10 + $0x3d8] sm:$0xff]
      %v213 = vld [vmem:[#allocation10 + $0x3e0] sm:$0xff]
      %v214 = vld [vmem:[#allocation10 + $0x3e8] sm:$0xff]
      %v215 = vld [vmem:[#allocation10 + $0x3f0] sm:$0xff]
      %v216 = vld [vmem:[#allocation10 + $0x3f8] sm:$0xff]
      %v217 = vld [vmem:[#allocation10 + $0x400] sm:$0xff]
      %v218 = vld [vmem:[#allocation10 + $0x408] sm:$0xff]
      %v219 = vld [vmem:[#allocation10 + $0x410] sm:$0xff]
      %v220 = vld [vmem:[#allocation10 + $0x418] sm:$0xff]
      %v221 = vld [vmem:[#allocation10 + $0x420] sm:$0xff]
      %v222 = vld [vmem:[#allocation10 + $0x428] sm:$0xff]
      %v223 = vld [vmem:[#allocation10 + $0x430] sm:$0xff]
      %v224 = vld [vmem:[#allocation10 + $0x438] sm:$0xff]
      %v225 = vld [vmem:[#allocation10 + $0x440] sm:$0xff]
      %v226 = vld [vmem:[#allocation10 + $0x448] sm:$0xff]
      %v227 = vld [vmem:[#allocation10 + $0x450] sm:$0xff]
      %v228 = vld [vmem:[#allocation10 + $0x458] sm:$0xff]
      %v229 = vld [vmem:[#allocation10 + $0x460] sm:$0xff]
      %v230 = vld [vmem:[#allocation10 + $0x468] sm:$0xff]
      %v231 = vld [vmem:[#allocation10 + $0x470] sm:$0xff]
      %v232 = vld [vmem:[#allocation10 + $0x478] sm:$0xff]
      %v233 = vld [vmem:[#allocation10 + $0x480] sm:$0xff]
      %v234 = vld [vmem:[#allocation10 + $0x488] sm:$0xff]
      %v235 = vld [vmem:[#allocation10 + $0x490] sm:$0xff]
      %v236 = vld [vmem:[#allocation10 + $0x498] sm:$0xff]
      %v237 = vld [vmem:[#allocation10 + $0x4a0] sm:$0xff]
      %v238 = vld [vmem:[#allocation10 + $0x4a8] sm:$0xff]
      %v239 = vld [vmem:[#allocation10 + $0x4b0] sm:$0xff]
      %v240 = vld [vmem:[#allocation10 + $0x4b8] sm:$0xff]
      %v241 = vld [vmem:[#allocation10 + $0x4c0] sm:$0xff]
      %v242 = vld [vmem:[#allocation10 + $0x4c8] sm:$0xff]
      %v243 = vld [vmem:[#allocation10 + $0x4d0] sm:$0xff]
      %v244 = vld [vmem:[#allocation10 + $0x4d8] sm:$0xff]
      %v245 = vld [vmem:[#allocation10 + $0x4e0] sm:$0xff]
      %v246 = vld [vmem:[#allocation10 + $0x4e8] sm:$0xff]
      %v247 = vld [vmem:[#allocation10 + $0x4f0] sm:$0xff]
      %v248 = vld [vmem:[#allocation10 + $0x4f8] sm:$0xff]
      %v249 = vld [vmem:[#allocation10 + $0x500] sm:$0xff]
      %v250 = vld [vmem:[#allocation10 + $0x508] sm:$0xff]
      %v251 = vld [vmem:[#allocation10 + $0x510] sm:$0xff]
      %v252 = vld [vmem:[#allocation10 + $0x518] sm:$0xff]
      %v253 = vld [vmem:[#allocation10 + $0x520] sm:$0xff]
      %v254 = vld [vmem:[#allocation10 + $0x528] sm:$0xff]
      %v255 = vld [vmem:[#allocation10 + $0x530] sm:$0xff]
      %v256 = vld [vmem:[#allocation10 + $0x538] sm:$0xff]
      %v257 = vld [vmem:[#allocation10 + $0x540] sm:$0xff]
      %v258 = vld [vmem:[#allocation10 + $0x548] sm:$0xff]
      %v259 = vld [vmem:[#allocation10 + $0x550] sm:$0xff]
      %v260 = vld [vmem:[#allocation10 + $0x558] sm:$0xff]
      %v261 = vld [vmem:[#allocation10 + $0x560] sm:$0xff]
      %v262 = vld [vmem:[#allocation10 + $0x568] sm:$0xff]
      %v263 = vld [vmem:[#allocation10 + $0x570] sm:$0xff]
      %v264 = vld [vmem:[#allocation10 + $0x578] sm:$0xff]
      %v265 = vld [vmem:[#allocation10 + $0x580] sm:$0xff]
      %v266 = vld [vmem:[#allocation10 + $0x588] sm:$0xff]
      %v267 = vld [vmem:[#allocation10 + $0x590] sm:$0xff]
      %v268 = vld [vmem:[#allocation10 + $0x598] sm:$0xff]
      %v269 = vld [vmem:[#allocation10 + $0x5a0] sm:$0xff]
      %v270 = vld [vmem:[#allocation10 + $0x5a8] sm:$0xff]
      %v271 = vld [vmem:[#allocation10 + $0x5b0] sm:$0xff]
      %v272 = vld [vmem:[#allocation10 + $0x5b8] sm:$0xff]
      %v273 = vld [vmem:[#allocation10 + $0x5c0] sm:$0xff]
      %v274 = vld [vmem:[#allocation10 + $0x5c8] sm:$0xff]
      %v275 = vld [vmem:[#allocation10 + $0x5d0] sm:$0xff]
      %v276 = vld [vmem:[#allocation10 + $0x5d8] sm:$0xff]
      %v277 = vld [vmem:[#allocation10 + $0x5e0] sm:$0xff]
      %v278 = vld [vmem:[#allocation10 + $0x5e8] sm:$0xff]
      %v279 = vld [vmem:[#allocation10 + $0x5f0] sm:$0xff]
      %v280 = vld [vmem:[#allocation10 + $0x5f8] sm:$0xff]
      %v281 = vld [vmem:[#allocation10 + $0x600] sm:$0xff]
      %v282 = vld [vmem:[#allocation10 + $0x608] sm:$0xff]
      %v283 = vld [vmem:[#allocation10 + $0x610] sm:$0xff]
      %v284 = vld [vmem:[#allocation10 + $0x618] sm:$0xff]
      %v285 = vld [vmem:[#allocation10 + $0x620] sm:$0xff]
      %v286 = vld [vmem:[#allocation10 + $0x628] sm:$0xff]
      %v287 = vld [vmem:[#allocation10 + $0x630] sm:$0xff]
      %v288 = vld [vmem:[#allocation10 + $0x638] sm:$0xff]
      %v289 = vld [vmem:[#allocation10 + $0x640] sm:$0xff]
      %v290 = vld [vmem:[#allocation10 + $0x648] sm:$0xff]
      %v291 = vld [vmem:[#allocation10 + $0x650] sm:$0xff]
      %v292 = vld [vmem:[#allocation10 + $0x658] sm:$0xff]
      %v293 = vld [vmem:[#allocation10 + $0x660] sm:$0xff]
      %v294 = vld [vmem:[#allocation10 + $0x668] sm:$0xff]
      %v295 = vld [vmem:[#allocation10 + $0x670] sm:$0xff]
      %v296 = vld [vmem:[#allocation10 + $0x678] sm:$0xff]
      %v297 = vld [vmem:[#allocation10 + $0x680] sm:$0xff]
      %v298 = vld [vmem:[#allocation10 + $0x688] sm:$0xff]
      %v299 = vld [vmem:[#allocation10 + $0x690] sm:$0xff]
      %v300 = vld [vmem:[#allocation10 + $0x698] sm:$0xff]
      %v301 = vld [vmem:[#allocation10 + $0x6a0] sm:$0xff]
      %v302 = vld [vmem:[#allocation10 + $0x6a8] sm:$0xff]
      %v303 = vld [vmem:[#allocation10 + $0x6b0] sm:$0xff]
      %v304 = vld [vmem:[#allocation10 + $0x6b8] sm:$0xff]
      %v305 = vld [vmem:[#allocation10 + $0x6c0] sm:$0xff]
      %v306 = vld [vmem:[#allocation10 + $0x6c8] sm:$0xff]
      %v307 = vld [vmem:[#allocation10 + $0x6d0] sm:$0xff]
      %v308 = vld [vmem:[#allocation10 + $0x6d8] sm:$0xff]
      %v309 = vld [vmem:[#allocation10 + $0x6e0] sm:$0xff]
      %v310 = vld [vmem:[#allocation10 + $0x6e8] sm:$0xff]
      %v311 = vld [vmem:[#allocation10 + $0x6f0] sm:$0xff]
      %v312 = vld [vmem:[#allocation10 + $0x6f8] sm:$0xff]
      %v313 = vld [vmem:[#allocation10 + $0x700] sm:$0xff]
      %v314 = vld [vmem:[#allocation10 + $0x708] sm:$0xff]
      %v315 = vld [vmem:[#allocation10 + $0x710] sm:$0xff]
      %v316 = vld [vmem:[#allocation10 + $0x718] sm:$0xff]
      %v317 = vld [vmem:[#allocation10 + $0x720] sm:$0xff]
      %v318 = vld [vmem:[#allocation10 + $0x728] sm:$0xff]
      %v319 = vld [vmem:[#allocation10 + $0x730] sm:$0xff]
      %v320 = vld [vmem:[#allocation10 + $0x738] sm:$0xff]
      %v321 = vld [vmem:[#allocation10 + $0x740] sm:$0xff]
      %v322 = vld [vmem:[#allocation10 + $0x748] sm:$0xff]
      %v323 = vld [vmem:[#allocation10 + $0x750] sm:$0xff]
      %v324 = vld [vmem:[#allocation10 + $0x758] sm:$0xff]
      %v325 = vld [vmem:[#allocation10 + $0x760] sm:$0xff]
      %v326 = vld [vmem:[#allocation10 + $0x768] sm:$0xff]
      %v327 = vld [vmem:[#allocation10 + $0x770] sm:$0xff]
      %v328 = vld [vmem:[#allocation10 + $0x778] sm:$0xff]
      %v329 = vld [vmem:[#allocation10 + $0x780] sm:$0xff]
      %v330 = vld [vmem:[#allocation10 + $0x788] sm:$0xff]
      %v331 = vld [vmem:[#allocation10 + $0x790] sm:$0xff]
      %v332 = vld [vmem:[#allocation10 + $0x798] sm:$0xff]
      %v333 = vld [vmem:[#allocation10 + $0x7a0] sm:$0xff]
      %v334 = vld [vmem:[#allocation10 + $0x7a8] sm:$0xff]
      %v335 = vld [vmem:[#allocation10 + $0x7b0] sm:$0xff]
      %v336 = vld [vmem:[#allocation10 + $0x7b8] sm:$0xff]
      %v337 = vld [vmem:[#allocation10 + $0x7c0] sm:$0xff]
      %v338 = vld [vmem:[#allocation10 + $0x7c8] sm:$0xff]
      %v339 = vld [vmem:[#allocation10 + $0x7d0] sm:$0xff]
      %v340 = vld [vmem:[#allocation10 + $0x7d8] sm:$0xff]
      %v341 = vld [vmem:[#allocation10 + $0x7e0] sm:$0xff]
      %v342 = vld [vmem:[#allocation10 + $0x7e8] sm:$0xff]
      %v343 = vld [vmem:[#allocation10 + $0x7f0] sm:$0xff]
      %v344 = vld [vmem:[#allocation10 + $0x7f8] sm:$0xff]
      %v345 = vld [vmem:[%s2] sm:$0xf]
      %v347 = vlaneseq
      %v348 = vshrl.u32 %v347, 7
      %v349 = vsub.s32 0, %v348
      %v350 = vrot.slane %v345, %v349
      %v351 = vlaneseq
      %v352 = vshrl.u32 %v351, 7
      %v353 = vsub.s32 1, %v352
      %v354 = vrot.slane %v345, %v353
      %v355 = vlaneseq
      %v356 = vshrl.u32 %v355, 7
      %v357 = vsub.s32 2, %v356
      %v358 = vrot.slane %v345, %v357
      %v359 = vlaneseq
      %v360 = vshrl.u32 %v359, 7
      %v361 = vsub.s32 3, %v360
      %v362 = vrot.slane %v345, %v361
      %367 = vmatprep.subr.mxu0 %v90
      %368 = vmatpush1.msra.mxu0 %v89
      %369 = vmatprep.subr.mxu0 %v94
      %370 = vmatpush1.msra.mxu0 %v93
      %371 = vmatprep.subr.mxu0 %v98
      %372 = vmatpush1.msra.mxu0 %v97
      %373 = vmatprep.subr.mxu0 %v102
      %374 = vmatpush1.msra.mxu0 %v101
      %375 = vmatprep.subr.mxu0 %v106
      %376 = vmatpush1.msra.mxu0 %v105
      %377 = vmatprep.subr.mxu0 %v110
      %378 = vmatpush1.msra.mxu0 %v109
      %379 = vmatprep.subr.mxu0 %v114
      %380 = vmatpush1.msra.mxu0 %v113
      %381 = vmatprep.subr.mxu0 %v118
      %382 = vmatpush1.msra.mxu0 %v117
      %383 = vmatprep.subr.mxu0 %v122
      %384 = vmatpush1.msra.mxu0 %v121
      %385 = vmatprep.subr.mxu0 %v126
      %386 = vmatpush1.msra.mxu0 %v125
      %387 = vmatprep.subr.mxu0 %v130
      %388 = vmatpush1.msra.mxu0 %v129
      %389 = vmatprep.subr.mxu0 %v134
      %390 = vmatpush1.msra.mxu0 %v133
      %391 = vmatprep.subr.mxu0 %v138
      %392 = vmatpush1.msra.mxu0 %v137
      %393 = vmatprep.subr.mxu0 %v142
      %394 = vmatpush1.msra.mxu0 %v141
      %395 = vmatprep.subr.mxu0 %v146
      %396 = vmatpush1.msra.mxu0 %v145
      %397 = vmatprep.subr.mxu0 %v150
      %398 = vmatpush1.msra.mxu0 %v149
      %399 = vmatprep.subr.mxu0 %v154
      %400 = vmatpush1.msra.mxu0 %v153
      %401 = vmatprep.subr.mxu0 %v158
      %402 = vmatpush1.msra.mxu0 %v157
      %403 = vmatprep.subr.mxu0 %v162
      %404 = vmatpush1.msra.mxu0 %v161
      %405 = vmatprep.subr.mxu0 %v166
      %406 = vmatpush1.msra.mxu0 %v165
      %407 = vmatprep.subr.mxu0 %v170
      %408 = vmatpush1.msra.mxu0 %v169
      %409 = vmatprep.subr.mxu0 %v174
      %410 = vmatpush1.msra.mxu0 %v173
      %411 = vmatprep.subr.mxu0 %v178
      %412 = vmatpush1.msra.mxu0 %v177
      %413 = vmatprep.subr.mxu0 %v182
      %414 = vmatpush1.msra.mxu0 %v181
      %415 = vmatprep.subr.mxu0 %v186
      %416 = vmatpush1.msra.mxu0 %v185
      %417 = vmatprep.subr.mxu0 %v190
      %418 = vmatpush1.msra.mxu0 %v189
      %419 = vmatprep.subr.mxu0 %v194
      %420 = vmatpush1.msra.mxu0 %v193
      %421 = vmatprep.subr.mxu0 %v198
      %422 = vmatpush1.msra.mxu0 %v197
      %423 = vmatprep.subr.mxu0 %v202
      %424 = vmatpush1.msra.mxu0 %v201
      %425 = vmatprep.subr.mxu0 %v206
      %426 = vmatpush1.msra.mxu0 %v205
      %427 = vmatprep.subr.mxu0 %v210
      %428 = vmatpush1.msra.mxu0 %v209
      %429 = vmatprep.subr.mxu0 %v214
      %430 = vmatpush1.msra.mxu0 %v213
      %431 = vmatprep.mubr.f32.mxu0 %v86
      %432 = vmatmul.mubr.f32.gmra.mrb[0].mxu0 %v85
      %v433 = vpop.f32.mrb[0].mxu0
      %v434 = vadd.f32 %v350, %v433
      %v435 = vpop.f32.mrb[0].mxu0
      %v436 = vadd.f32 %v354, %v435
      %437 = vdwg.mxu0
      %438 = vmatprep.subr.mxu0 %v218
      %439 = vmatpush1.msra.mxu0 %v217
      %440 = vmatprep.subr.mxu0 %v222
      %441 = vmatpush1.msra.mxu0 %v221
      %442 = vmatprep.subr.mxu0 %v226
      %443 = vmatpush1.msra.mxu0 %v225
      %444 = vmatprep.subr.mxu0 %v230
      %445 = vmatpush1.msra.mxu0 %v229
      %446 = vmatprep.subr.mxu0 %v234
      %447 = vmatpush1.msra.mxu0 %v233
      %448 = vmatprep.subr.mxu0 %v238
      %449 = vmatpush1.msra.mxu0 %v237
      %450 = vmatprep.subr.mxu0 %v242
      %451 = vmatpush1.msra.mxu0 %v241
      %452 = vmatprep.subr.mxu0 %v246
      %453 = vmatpush1.msra.mxu0 %v245
      %454 = vmatprep.subr.mxu0 %v250
      %455 = vmatpush1.msra.mxu0 %v249
      %456 = vmatprep.subr.mxu0 %v254
      %457 = vmatpush1.msra.mxu0 %v253
      %458 = vmatprep.subr.mxu0 %v258
      %459 = vmatpush1.msra.mxu0 %v257
      %460 = vmatprep.subr.mxu0 %v262
      %461 = vmatpush1.msra.mxu0 %v261
      %462 = vmatprep.subr.mxu0 %v266
      %463 = vmatpush1.msra.mxu0 %v265
      %464 = vmatprep.subr.mxu0 %v270
      %465 = vmatpush1.msra.mxu0 %v269
      %466 = vmatprep.subr.mxu0 %v274
      %467 = vmatpush1.msra.mxu0 %v273
      %468 = vmatprep.subr.mxu0 %v278
      %469 = vmatpush1.msra.mxu0 %v277
      %470 = vmatprep.subr.mxu0 %v282
      %471 = vmatpush1.msra.mxu0 %v281
      %472 = vmatprep.subr.mxu0 %v286
      %473 = vmatpush1.msra.mxu0 %v285
      %474 = vmatprep.subr.mxu0 %v290
      %475 = vmatpush1.msra.mxu0 %v289
      %476 = vmatprep.subr.mxu0 %v294
      %477 = vmatpush1.msra.mxu0 %v293
      %478 = vmatprep.subr.mxu0 %v298
      %479 = vmatpush1.msra.mxu0 %v297
      %480 = vmatprep.subr.mxu0 %v302
      %481 = vmatpush1.msra.mxu0 %v301
      %482 = vmatprep.subr.mxu0 %v306
      %483 = vmatpush1.msra.mxu0 %v305
      %484 = vmatprep.subr.mxu0 %v310
      %485 = vmatpush1.msra.mxu0 %v309
      %486 = vmatprep.subr.mxu0 %v314
      %487 = vmatpush1.msra.mxu0 %v313
      %488 = vmatprep.subr.mxu0 %v318
      %489 = vmatpush1.msra.mxu0 %v317
      %490 = vmatprep.subr.mxu0 %v322
      %491 = vmatpush1.msra.mxu0 %v321
      %492 = vmatprep.subr.mxu0 %v326
      %493 = vmatpush1.msra.mxu0 %v325
      %494 = vmatprep.subr.mxu0 %v330
      %495 = vmatpush1.msra.mxu0 %v329
      %496 = vmatprep.subr.mxu0 %v334
      %497 = vmatpush1.msra.mxu0 %v333
      %498 = vmatprep.subr.mxu0 %v338
      %499 = vmatpush1.msra.mxu0 %v337
      %500 = vmatprep.subr.mxu0 %v342
      %501 = vmatpush1.msra.mxu0 %v341
      %502 = vmatprep.mubr.f32.mxu0 %v88
      %503 = vmatmul.mubr.f32.gmra.mrb[0].mxu0 %v87
      %v504 = vpop.f32.mrb[0].mxu0
      %v505 = vadd.f32 %v434, %v504
      %v506 = vpop.f32.mrb[0].mxu0
      %v507 = vadd.f32 %v436, %v506
      %508 = vdwg.mxu0
      %509 = vmatprep.subr.mxu0 %v92
      %510 = vmatpush1.msra.mxu0 %v91
      %511 = vmatprep.subr.mxu0 %v96
      %512 = vmatpush1.msra.mxu0 %v95
      %513 = vmatprep.subr.mxu0 %v100
      %514 = vmatpush1.msra.mxu0 %v99
      %515 = vmatprep.subr.mxu0 %v104
      %516 = vmatpush1.msra.mxu0 %v103
      %517 = vmatprep.subr.mxu0 %v108
      %518 = vmatpush1.msra.mxu0 %v107
      %519 = vmatprep.subr.mxu0 %v112
      %520 = vmatpush1.msra.mxu0 %v111
      %521 = vmatprep.subr.mxu0 %v116
      %522 = vmatpush1.msra.mxu0 %v115
      %523 = vmatprep.subr.mxu0 %v120
      %524 = vmatpush1.msra.mxu0 %v119
      %525 = vmatprep.subr.mxu0 %v124
      %526 = vmatpush1.msra.mxu0 %v123
      %527 = vmatprep.subr.mxu0 %v128
      %528 = vmatpush1.msra.mxu0 %v127
      %529 = vmatprep.subr.mxu0 %v132
      %530 = vmatpush1.msra.mxu0 %v131
      %531 = vmatprep.subr.mxu0 %v136
      %532 = vmatpush1.msra.mxu0 %v135
      %533 = vmatprep.subr.mxu0 %v140
      %534 = vmatpush1.msra.mxu0 %v139
      %535 = vmatprep.subr.mxu0 %v144
      %536 = vmatpush1.msra.mxu0 %v143
      %537 = vmatprep.subr.mxu0 %v148
      %538 = vmatpush1.msra.mxu0 %v147
      %539 = vmatprep.subr.mxu0 %v152
      %540 = vmatpush1.msra.mxu0 %v151
      %541 = vmatprep.subr.mxu0 %v156
      %542 = vmatpush1.msra.mxu0 %v155
      %543 = vmatprep.subr.mxu0 %v160
      %544 = vmatpush1.msra.mxu0 %v159
      %545 = vmatprep.subr.mxu0 %v164
      %546 = vmatpush1.msra.mxu0 %v163
      %547 = vmatprep.subr.mxu0 %v168
      %548 = vmatpush1.msra.mxu0 %v167
      %549 = vmatprep.subr.mxu0 %v172
      %550 = vmatpush1.msra.mxu0 %v171
      %551 = vmatprep.subr.mxu0 %v176
      %552 = vmatpush1.msra.mxu0 %v175
      %553 = vmatprep.subr.mxu0 %v180
      %554 = vmatpush1.msra.mxu0 %v179
      %555 = vmatprep.subr.mxu0 %v184
      %556 = vmatpush1.msra.mxu0 %v183
      %557 = vmatprep.subr.mxu0 %v188
      %558 = vmatpush1.msra.mxu0 %v187
      %559 = vmatprep.subr.mxu0 %v192
      %560 = vmatpush1.msra.mxu0 %v191
      %561 = vmatprep.subr.mxu0 %v196
      %562 = vmatpush1.msra.mxu0 %v195
      %563 = vmatprep.subr.mxu0 %v200
      %564 = vmatpush1.msra.mxu0 %v199
      %565 = vmatprep.subr.mxu0 %v204
      %566 = vmatpush1.msra.mxu0 %v203
      %567 = vmatprep.subr.mxu0 %v208
      %568 = vmatpush1.msra.mxu0 %v207
      %569 = vmatprep.subr.mxu0 %v212
      %570 = vmatpush1.msra.mxu0 %v211
      %571 = vmatprep.subr.mxu0 %v216
      %572 = vmatpush1.msra.mxu0 %v215
      %573 = vmatprep.mubr.f32.mxu0 %v86
      %574 = vmatmul.mubr.f32.gmra.mrb[0].mxu0 %v85
      %v575 = vpop.f32.mrb[0].mxu0
      %v576 = vadd.f32 %v358, %v575
      %v577 = vpop.f32.mrb[0].mxu0
      %v578 = vadd.f32 %v362, %v577
      %579 = vdwg.mxu0
      %580 = vmatprep.subr.mxu0 %v220
      %581 = vmatpush1.msra.mxu0 %v219
      %582 = vmatprep.subr.mxu0 %v224
      %583 = vmatpush1.msra.mxu0 %v223
      %584 = vmatprep.subr.mxu0 %v228
      %585 = vmatpush1.msra.mxu0 %v227
      %586 = vmatprep.subr.mxu0 %v232
      %587 = vmatpush1.msra.mxu0 %v231
      %588 = vmatprep.subr.mxu0 %v236
      %589 = vmatpush1.msra.mxu0 %v235
      %590 = vmatprep.subr.mxu0 %v240
      %591 = vmatpush1.msra.mxu0 %v239
      %592 = vmatprep.subr.mxu0 %v244
      %593 = vmatpush1.msra.mxu0 %v243
      %594 = vmatprep.subr.mxu0 %v248
      %595 = vmatpush1.msra.mxu0 %v247
      %596 = vmatprep.subr.mxu0 %v252
      %597 = vmatpush1.msra.mxu0 %v251
      %598 = vmatprep.subr.mxu0 %v256
      %599 = vmatpush1.msra.mxu0 %v255
      %600 = vmatprep.subr.mxu0 %v260
      %601 = vmatpush1.msra.mxu0 %v259
      %602 = vmatprep.subr.mxu0 %v264
      %603 = vmatpush1.msra.mxu0 %v263
      %604 = vmatprep.subr.mxu0 %v268
      %605 = vmatpush1.msra.mxu0 %v267
      %606 = vmatprep.subr.mxu0 %v272
      %607 = vmatpush1.msra.mxu0 %v271
      %608 = vmatprep.subr.mxu0 %v276
      %609 = vmatpush1.msra.mxu0 %v275
      %610 = vmatprep.subr.mxu0 %v280
      %611 = vmatpush1.msra.mxu0 %v279
      %612 = vmatprep.subr.mxu0 %v284
      %613 = vmatpush1.msra.mxu0 %v283
      %614 = vmatprep.subr.mxu0 %v288
      %615 = vmatpush1.msra.mxu0 %v287
      %616 = vmatprep.subr.mxu0 %v292
      %617 = vmatpush1.msra.mxu0 %v291
      %618 = vmatprep.subr.mxu0 %v296
      %619 = vmatpush1.msra.mxu0 %v295
      %620 = vmatprep.subr.mxu0 %v300
      %621 = vmatpush1.msra.mxu0 %v299
      %622 = vmatprep.subr.mxu0 %v304
      %623 = vmatpush1.msra.mxu0 %v303
      %624 = vmatprep.subr.mxu0 %v308
      %625 = vmatpush1.msra.mxu0 %v307
      %626 = vmatprep.subr.mxu0 %v312
      %627 = vmatpush1.msra.mxu0 %v311
      %628 = vmatprep.subr.mxu0 %v316
      %629 = vmatpush1.msra.mxu0 %v315
      %630 = vmatprep.subr.mxu0 %v320
      %631 = vmatpush1.msra.mxu0 %v319
      %632 = vmatprep.subr.mxu0 %v324
      %633 = vmatpush1.msra.mxu0 %v323
      %634 = vmatprep.subr.mxu0 %v328
      %635 = vmatpush1.msra.mxu0 %v327
      %636 = vmatprep.subr.mxu0 %v332
      %637 = vmatpush1.msra.mxu0 %v331
      %638 = vmatprep.subr.mxu0 %v336
      %639 = vmatpush1.msra.mxu0 %v335
      %640 = vmatprep.subr.mxu0 %v340
      %641 = vmatpush1.msra.mxu0 %v339
      %642 = vmatprep.subr.mxu0 %v344
      %643 = vmatpush1.msra.mxu0 %v343
      %644 = vmatprep.mubr.f32.mxu0 %v88
      %645 = vmatmul.mubr.f32.gmra.mrb[0].mxu0 %v87
      %v646 = vpop.f32.mrb[0].mxu0
      %v647 = vadd.f32 %v576, %v646
      %v648 = vpop.f32.mrb[0].mxu0
      %v649 = vadd.f32 %v578, %v648
      %650 = vdwg.mxu0
      %651 = vst [vmem:[#allocation2] sm:$0xff] %v505
      %652 = vst [vmem:[#allocation2 + $0x8] sm:$0xff] %v507
      %653 = vst [vmem:[#allocation2 + $0x10] sm:$0xff] %v647
      %654 = vst [vmem:[#allocation2 + $0x18] sm:$0xff] %v649
      %vm655 = vcmask 7168
      %656 = vst.msk [vmem:[#allocation3] sm:$0xff] %vm655, -inf
      %657 = vst.msk [vmem:[#allocation4] sm:$0xff] %vm655, 0.0
      %658 = vst [vmem:[#allocation5] sm:$0xff] 0.0
      %659 = vst [vmem:[#allocation5 + $0x8] sm:$0xff] 0.0
      %660 = vst [vmem:[#allocation5 + $0x10] sm:$0xff] 0.0
      %661 = vst [vmem:[#allocation5 + $0x18] sm:$0xff] 0.0
    $region49: #{tpu_custom_call.1} parent=1 // pred_fallthru
      _
    %v662 = vld [vmem:[#allocation2] sm:$0xff]
    %v663 = vld [vmem:[#allocation2 + $0x8] sm:$0xff]
    %v664 = vld [vmem:[#allocation2 + $0x10] sm:$0xff]
    %v665 = vld [vmem:[#allocation2 + $0x18] sm:$0xff]
    %v666 = vld [vmem:[#allocation13] sm:$0xff]
    %v667 = vld [vmem:[#allocation13 + $0x8] sm:$0xff]
    %v668 = vld [vmem:[#allocation13 + $0x10] sm:$0xff]
    %v669 = vld [vmem:[#allocation13 + $0x18] sm:$0xff]
    %v670 = vld [vmem:[#allocation13 + $0x20] sm:$0xff]
    %v671 = vld [vmem:[#allocation13 + $0x28] sm:$0xff]
    %v672 = vld [vmem:[#allocation13 + $0x30] sm:$0xff]
    %v673 = vld [vmem:[#allocation13 + $0x38] sm:$0xff]
    %v674 = vld [vmem:[#allocation13 + $0x40] sm:$0xff]
    %v675 = vld [vmem:[#allocation13 + $0x48] sm:$0xff]
    %v676 = vld [vmem:[#allocation13 + $0x50] sm:$0xff]
    %v677 = vld [vmem:[#allocation13 + $0x58] sm:$0xff]
    %v678 = vld [vmem:[#allocation13 + $0x60] sm:$0xff]
    %v679 = vld [vmem:[#allocation13 + $0x68] sm:$0xff]
    %v680 = vld [vmem:[#allocation13 + $0x70] sm:$0xff]
    %v681 = vld [vmem:[#allocation13 + $0x78] sm:$0xff]
    %v682 = vld [vmem:[#allocation13 + $0x80] sm:$0xff]
    %v683 = vld [vmem:[#allocation13 + $0x88] sm:$0xff]
    %v684 = vld [vmem:[#allocation13 + $0x90] sm:$0xff]
    %v685 = vld [vmem:[#allocation13 + $0x98] sm:$0xff]
    %v686 = vld [vmem:[#allocation13 + $0xa0] sm:$0xff]
    %v687 = vld [vmem:[#allocation13 + $0xa8] sm:$0xff]
    %v688 = vld [vmem:[#allocation13 + $0xb0] sm:$0xff]
    %v689 = vld [vmem:[#allocation13 + $0xb8] sm:$0xff]
    %v690 = vld [vmem:[#allocation13 + $0xc0] sm:$0xff]
    %v691 = vld [vmem:[#allocation13 + $0xc8] sm:$0xff]
    %v692 = vld [vmem:[#allocation13 + $0xd0] sm:$0xff]
    %v693 = vld [vmem:[#allocation13 + $0xd8] sm:$0xff]
    %v694 = vld [vmem:[#allocation13 + $0xe0] sm:$0xff]
    %v695 = vld [vmem:[#allocation13 + $0xe8] sm:$0xff]
    %v696 = vld [vmem:[#allocation13 + $0xf0] sm:$0xff]
    %v697 = vld [vmem:[#allocation13 + $0xf8] sm:$0xff]
    %v702 = vcombine.low %v662, %v663
    %v703 = vcombine.high %v662, %v663
    %v704 = vcombine.low %v664, %v665
    %v705 = vcombine.high %v664, %v665
    %v707 = vunpack.c.l.s4 1966171168
    %v708 = vunpack.c.0.s8 %v707
    %v709 = vlaneseq
    %v710 = vshrl.u32 %v709, 7
    %v711 = vsub.s32 %v708, %v710
    %v712 = vrot.slane %v702, %v711
    %v714 = vunpack.c.l.s4 1966171168
    %v715 = vunpack.c.0.s8 %v714
    %v716 = vlaneseq
    %v717 = vshrl.u32 %v716, 7
    %v718 = vsub.s32 %v715, %v717
    %v719 = vrot.slane %v703, %v718
    %v721 = vunpack.c.l.s4 1966171168
    %v722 = vunpack.c.0.s8 %v721
    %v723 = vlaneseq
    %v724 = vshrl.u32 %v723, 7
    %v725 = vsub.s32 %v722, %v724
    %v726 = vrot.slane %v704, %v725
    %v728 = vunpack.c.l.s4 1966171168
    %v729 = vunpack.c.0.s8 %v728
    %v730 = vlaneseq
    %v731 = vshrl.u32 %v730, 7
    %v732 = vsub.s32 %v729, %v731
    %v733 = vrot.slane %v705, %v732
    %v734 = vcombine.low %v712, %v726
    %v735 = vcombine.high %v712, %v726
    %v736 = vcombine.low %v719, %v733
    %v737 = vcombine.high %v719, %v733
    %v739 = vunpack.c.l.s4 1966171168
    %v740 = vunpack.c.0.s8 %v739
    %v741 = vlaneseq
    %v742 = vshrl.u32 %v741, 7
    %v743 = vsub.s32 %v740, %v742
    %v744 = vrot.slane %v734, %v743
    %v746 = vunpack.c.l.s4 1966171168
    %v747 = vunpack.c.0.s8 %v746
    %v748 = vlaneseq
    %v749 = vshrl.u32 %v748, 7
    %v750 = vsub.s32 %v747, %v749
    %v751 = vrot.slane %v736, %v750
    %v753 = vunpack.c.l.s4 1966171168
    %v754 = vunpack.c.0.s8 %v753
    %v755 = vlaneseq
    %v756 = vshrl.u32 %v755, 7
    %v757 = vsub.s32 %v754, %v756
    %v758 = vrot.slane %v735, %v757
    %v760 = vunpack.c.l.s4 1966171168
    %v761 = vunpack.c.0.s8 %v760
    %v762 = vlaneseq
    %v763 = vshrl.u32 %v762, 7
    %v764 = vsub.s32 %v761, %v763
    %v765 = vrot.slane %v737, %v764
    %v766 = vcombine.high %v744, %v744
    %v767 = vcombine.high %v751, %v751
    %v768 = vcombine.high %v758, %v758
    %v769 = vcombine.high %v765, %v765
    %v770 = vlaneseq
    %v771 = vshrl.u32 %v770, 7
    %v772 = vsub.s32 0, %v771
    %v773 = vrot.slane %v744, %v772
    %v774 = vlaneseq
    %v775 = vshrl.u32 %v774, 7
    %v776 = vsub.s32 1, %v775
    %v777 = vrot.slane %v744, %v776
    %v778 = vlaneseq
    %v779 = vshrl.u32 %v778, 7
    %v780 = vsub.s32 2, %v779
    %v781 = vrot.slane %v744, %v780
    %v782 = vlaneseq
    %v783 = vshrl.u32 %v782, 7
    %v784 = vsub.s32 3, %v783
    %v785 = vrot.slane %v744, %v784
    %v786 = vlaneseq
    %v787 = vshrl.u32 %v786, 7
    %v788 = vsub.s32 0, %v787
    %v789 = vrot.slane %v758, %v788
    %v790 = vlaneseq
    %v791 = vshrl.u32 %v790, 7
    %v792 = vsub.s32 1, %v791
    %v793 = vrot.slane %v758, %v792
    %v794 = vlaneseq
    %v795 = vshrl.u32 %v794, 7
    %v796 = vsub.s32 2, %v795
    %v797 = vrot.slane %v758, %v796
    %v798 = vlaneseq
    %v799 = vshrl.u32 %v798, 7
    %v800 = vsub.s32 3, %v799
    %v801 = vrot.slane %v758, %v800
    %v802 = vlaneseq
    %v803 = vshrl.u32 %v802, 7
    %v804 = vsub.s32 0, %v803
    %v805 = vrot.slane %v766, %v804
    %v806 = vlaneseq
    %v807 = vshrl.u32 %v806, 7
    %v808 = vsub.s32 1, %v807
    %v809 = vrot.slane %v766, %v808
    %v810 = vlaneseq
    %v811 = vshrl.u32 %v810, 7
    %v812 = vsub.s32 2, %v811
    %v813 = vrot.slane %v766, %v812
    %v814 = vlaneseq
    %v815 = vshrl.u32 %v814, 7
    %v816 = vsub.s32 3, %v815
    %v817 = vrot.slane %v766, %v816
    %v818 = vlaneseq
    %v819 = vshrl.u32 %v818, 7
    %v820 = vsub.s32 0, %v819
    %v821 = vrot.slane %v768, %v820
    %v822 = vlaneseq
    %v823 = vshrl.u32 %v822, 7
    %v824 = vsub.s32 1, %v823
    %v825 = vrot.slane %v768, %v824
    %v826 = vlaneseq
    %v827 = vshrl.u32 %v826, 7
    %v828 = vsub.s32 2, %v827
    %v829 = vrot.slane %v768, %v828
    %v830 = vlaneseq
    %v831 = vshrl.u32 %v830, 7
    %v832 = vsub.s32 3, %v831
    %v833 = vrot.slane %v768, %v832
    %v834 = vlaneseq
    %v835 = vshrl.u32 %v834, 7
    %v836 = vsub.s32 0, %v835
    %v837 = vrot.slane %v751, %v836
    %v838 = vlaneseq
    %v839 = vshrl.u32 %v838, 7
    %v840 = vsub.s32 1, %v839
    %v841 = vrot.slane %v751, %v840
    %v842 = vlaneseq
    %v843 = vshrl.u32 %v842, 7
    %v844 = vsub.s32 2, %v843
    %v845 = vrot.slane %v751, %v844
    %v846 = vlaneseq
    %v847 = vshrl.u32 %v846, 7
    %v848 = vsub.s32 3, %v847
    %v849 = vrot.slane %v751, %v848
    %v850 = vlaneseq
    %v851 = vshrl.u32 %v850, 7
    %v852 = vsub.s32 0, %v851
    %v853 = vrot.slane %v765, %v852
    %v854 = vlaneseq
    %v855 = vshrl.u32 %v854, 7
    %v856 = vsub.s32 1, %v855
    %v857 = vrot.slane %v765, %v856
    %v858 = vlaneseq
    %v859 = vshrl.u32 %v858, 7
    %v860 = vsub.s32 2, %v859
    %v861 = vrot.slane %v765, %v860
    %v862 = vlaneseq
    %v863 = vshrl.u32 %v862, 7
    %v864 = vsub.s32 3, %v863
    %v865 = vrot.slane %v765, %v864
    %v866 = vlaneseq
    %v867 = vshrl.u32 %v866, 7
    %v868 = vsub.s32 0, %v867
    %v869 = vrot.slane %v767, %v868
    %v870 = vlaneseq
    %v871 = vshrl.u32 %v870, 7
    %v872 = vsub.s32 1, %v871
    %v873 = vrot.slane %v767, %v872
    %v874 = vlaneseq
    %v875 = vshrl.u32 %v874, 7
    %v876 = vsub.s32 2, %v875
    %v877 = vrot.slane %v767, %v876
    %v878 = vlaneseq
    %v879 = vshrl.u32 %v878, 7
    %v880 = vsub.s32 3, %v879
    %v881 = vrot.slane %v767, %v880
    %v882 = vlaneseq
    %v883 = vshrl.u32 %v882, 7
    %v884 = vsub.s32 0, %v883
    %v885 = vrot.slane %v769, %v884
    %v886 = vlaneseq
    %v887 = vshrl.u32 %v886, 7
    %v888 = vsub.s32 1, %v887
    %v889 = vrot.slane %v769, %v888
    %v890 = vlaneseq
    %v891 = vshrl.u32 %v890, 7
    %v892 = vsub.s32 2, %v891
    %v893 = vrot.slane %v769, %v892
    %v894 = vlaneseq
    %v895 = vshrl.u32 %v894, 7
    %v896 = vsub.s32 3, %v895
    %v897 = vrot.slane %v769, %v896
    %v930 = vadd.f32 %v666, %v773
    %v931 = vadd.f32 %v667, %v777
    %v932 = vadd.f32 %v668, %v781
    %v933 = vadd.f32 %v669, %v785
    %v934 = vadd.f32 %v670, %v789
    %v935 = vadd.f32 %v671, %v793
    %v936 = vadd.f32 %v672, %v797
    %v937 = vadd.f32 %v673, %v801
    %v938 = vadd.f32 %v674, %v805
    %v939 = vadd.f32 %v675, %v809
    %v940 = vadd.f32 %v676, %v813
    %v941 = vadd.f32 %v677, %v817
    %v942 = vadd.f32 %v678, %v821
    %v943 = vadd.f32 %v679, %v825
    %v944 = vadd.f32 %v680, %v829
    %v945 = vadd.f32 %v681, %v833
    %v946 = vadd.f32 %v682, %v837
    %v947 = vadd.f32 %v683, %v841
    %v948 = vadd.f32 %v684, %v845
    %v949 = vadd.f32 %v685, %v849
    %v950 = vadd.f32 %v686, %v853
    %v951 = vadd.f32 %v687, %v857
    %v952 = vadd.f32 %v688, %v861
    %v953 = vadd.f32 %v689, %v865
    %v954 = vadd.f32 %v690, %v869
    %v955 = vadd.f32 %v691, %v873
    %v956 = vadd.f32 %v692, %v877
    %v957 = vadd.f32 %v693, %v881
    %v958 = vadd.f32 %v694, %v885
    %v959 = vadd.f32 %v695, %v889
    %v960 = vadd.f32 %v696, %v893
    %v961 = vadd.f32 %v697, %v897
    %v962 = vtanh.pop %v930
    %v963 = vtanh.pop %v931
    %v964 = vtanh.pop %v932
    %v965 = vtanh.pop %v933
    %v966 = vtanh.pop %v934
    %v967 = vtanh.pop %v935
    %v968 = vtanh.pop %v936
    %v969 = vtanh.pop %v937
    %v970 = vtanh.pop %v938
    %v971 = vtanh.pop %v939
    %v972 = vtanh.pop %v940
    %v973 = vtanh.pop %v941
    %v974 = vtanh.pop %v942
    %v975 = vtanh.pop %v943
    %v976 = vtanh.pop %v944
    %v977 = vtanh.pop %v945
    %v978 = vtanh.pop %v946
    %v979 = vtanh.pop %v947
    %v980 = vtanh.pop %v948
    %v981 = vtanh.pop %v949
    %v982 = vtanh.pop %v950
    %v983 = vtanh.pop %v951
    %v984 = vtanh.pop %v952
    %v985 = vtanh.pop %v953
    %v986 = vtanh.pop %v954
    %v987 = vtanh.pop %v955
    %v988 = vtanh.pop %v956
    %v989 = vtanh.pop %v957
    %v990 = vtanh.pop %v958
    %v991 = vtanh.pop %v959
    %v992 = vtanh.pop %v960
    %v993 = vtanh.pop %v961
    %v994 = vld [vmem:[%s5] sm:$0xf]
    %v996 = vlaneseq
    %v997 = vshrl.u32 %v996, 7
    %v998 = vsub.s32 0, %v997
    %v999 = vrot.slane %v994, %v998
    %v1000 = vlaneseq
    %v1001 = vshrl.u32 %v1000, 7
    %v1002 = vsub.s32 1, %v1001
    %v1003 = vrot.slane %v994, %v1002
    %v1004 = vlaneseq
    %v1005 = vshrl.u32 %v1004, 7
    %v1006 = vsub.s32 2, %v1005
    %v1007 = vrot.slane %v994, %v1006
    %v1008 = vlaneseq
    %v1009 = vshrl.u32 %v1008, 7
    %v1010 = vsub.s32 3, %v1009
    %v1011 = vrot.slane %v994, %v1010
    %v1016 = vmul.f32 %v962, %v999
    %v1017 = vmul.f32 %v963, %v1003
    %v1018 = vmul.f32 %v964, %v1007
    %v1019 = vmul.f32 %v965, %v1011
    %v1020 = vmul.f32 %v966, %v999
    %v1021 = vmul.f32 %v967, %v1003
    %v1022 = vmul.f32 %v968, %v1007
    %v1023 = vmul.f32 %v969, %v1011
    %v1024 = vmul.f32 %v970, %v999
    %v1025 = vmul.f32 %v971, %v1003
    %v1026 = vmul.f32 %v972, %v1007
    %v1027 = vmul.f32 %v973, %v1011
    %v1028 = vmul.f32 %v974, %v999
    %v1029 = vmul.f32 %v975, %v1003
    %v1030 = vmul.f32 %v976, %v1007
    %v1031 = vmul.f32 %v977, %v1011
    %v1032 = vmul.f32 %v978, %v999
    %v1033 = vmul.f32 %v979, %v1003
    %v1034 = vmul.f32 %v980, %v1007
    %v1035 = vmul.f32 %v981, %v1011
    %v1036 = vmul.f32 %v982, %v999
    %v1037 = vmul.f32 %v983, %v1003
    %v1038 = vmul.f32 %v984, %v1007
    %v1039 = vmul.f32 %v985, %v1011
    %v1040 = vmul.f32 %v986, %v999
    %v1041 = vmul.f32 %v987, %v1003
    %v1042 = vmul.f32 %v988, %v1007
    %v1043 = vmul.f32 %v989, %v1011
    %v1044 = vmul.f32 %v990, %v999
    %v1045 = vmul.f32 %v991, %v1003
    %v1046 = vmul.f32 %v992, %v1007
    %v1047 = vmul.f32 %v993, %v1011
    %v1048 = vadd.f32 %v1016, %v1017
    %v1049 = vadd.f32 %v1048, %v1018
    %v1050 = vadd.f32 %v1049, %v1019
    %1051 = vadd.xlane.f32.xlu0 %v1050
    %v1052 = vpop.xlane.xlu0 %1051
    %v1053 = vadd.f32 %v1020, %v1021
    %v1054 = vadd.f32 %v1053, %v1022
    %v1055 = vadd.f32 %v1054, %v1023
    %1056 = vadd.xlane.f32.xlu0 %v1055
    %v1057 = vpop.xlane.xlu0 %1056
    %v1058 = vadd.f32 %v1024, %v1025
    %v1059 = vadd.f32 %v1058, %v1026
    %v1060 = vadd.f32 %v1059, %v1027
    %1061 = vadd.xlane.f32.xlu0 %v1060
    %v1062 = vpop.xlane.xlu0 %1061
    %v1063 = vadd.f32 %v1028, %v1029
    %v1064 = vadd.f32 %v1063, %v1030
    %v1065 = vadd.f32 %v1064, %v1031
    %1066 = vadd.xlane.f32.xlu0 %v1065
    %v1067 = vpop.xlane.xlu0 %1066
    %v1068 = vadd.f32 %v1032, %v1033
    %v1069 = vadd.f32 %v1068, %v1034
    %v1070 = vadd.f32 %v1069, %v1035
    %1071 = vadd.xlane.f32.xlu0 %v1070
    %v1072 = vpop.xlane.xlu0 %1071
    %v1073 = vadd.f32 %v1036, %v1037
    %v1074 = vadd.f32 %v1073, %v1038
    %v1075 = vadd.f32 %v1074, %v1039
    %1076 = vadd.xlane.f32.xlu0 %v1075
    %v1077 = vpop.xlane.xlu0 %1076
    %v1078 = vadd.f32 %v1040, %v1041
    %v1079 = vadd.f32 %v1078, %v1042
    %v1080 = vadd.f32 %v1079, %v1043
    %1081 = vadd.xlane.f32.xlu0 %v1080
    %v1082 = vpop.xlane.xlu0 %1081
    %v1083 = vadd.f32 %v1044, %v1045
    %v1084 = vadd.f32 %v1083, %v1046
    %v1085 = vadd.f32 %v1084, %v1047
    %1086 = vadd.xlane.f32.xlu0 %v1085
    %v1087 = vpop.xlane.xlu0 %1086
    %s1088 = sld [smem:[#allocation6]]
    %v1089 = vstv %s1088
    %v1090 = vadd.f32 %v1052, %v1089
    %v1091 = vadd.f32 %v1057, %v1089
    %v1092 = vadd.f32 %v1062, %v1089
    %v1093 = vadd.f32 %v1067, %v1089
    %v1094 = vadd.f32 %v1072, %v1089
    %v1095 = vadd.f32 %v1077, %v1089
    %v1096 = vadd.f32 %v1082, %v1089
    %v1097 = vadd.f32 %v1087, %v1089
    %v1098 = vld [vmem:[#allocation3] sm:$0xff]
    %v1107 = vlaneseq
    %v1108 = vand.u32 %v1107, 127
    %v1109 = vlaneseq
    %v1110 = vshrl.u32 %v1109, 7
    %v1111 = vsub.s32 %v1108, %v1110
    %v1112 = vrot.slane %v1090, %v1111
    %v1113 = vlaneseq
    %v1114 = vshrl.u32 %v1113, 7
    %v1115 = vsub.s32 %v1108, %v1114
    %v1116 = vrot.slane %v1091, %v1115
    %v1117 = vlaneseq
    %v1118 = vshrl.u32 %v1117, 7
    %v1119 = vsub.s32 %v1108, %v1118
    %v1120 = vrot.slane %v1092, %v1119
    %v1121 = vlaneseq
    %v1122 = vshrl.u32 %v1121, 7
    %v1123 = vsub.s32 %v1108, %v1122
    %v1124 = vrot.slane %v1093, %v1123
    %v1125 = vlaneseq
    %v1126 = vshrl.u32 %v1125, 7
    %v1127 = vsub.s32 %v1108, %v1126
    %v1128 = vrot.slane %v1094, %v1127
    %v1129 = vlaneseq
    %v1130 = vshrl.u32 %v1129, 7
    %v1131 = vsub.s32 %v1108, %v1130
    %v1132 = vrot.slane %v1095, %v1131
    %v1133 = vlaneseq
    %v1134 = vshrl.u32 %v1133, 7
    %v1135 = vsub.s32 %v1108, %v1134
    %v1136 = vrot.slane %v1096, %v1135
    %v1137 = vlaneseq
    %v1138 = vshrl.u32 %v1137, 7
    %v1139 = vsub.s32 %v1108, %v1138
    %v1140 = vrot.slane %v1097, %v1139
    %vm1141 = vcmask 1041409
    %v1142 = vsel %vm1141, %v1116, %v1112
    %vm1143 = vcmask 1042434
    %v1144 = vsel %vm1143, %v1120, %v1142
    %vm1145 = vcmask 1043459
    %v1146 = vsel %vm1145, %v1124, %v1144
    %vm1147 = vcmask 1044484
    %v1148 = vsel %vm1147, %v1128, %v1146
    %vm1149 = vcmask 1045509
    %v1150 = vsel %vm1149, %v1132, %v1148
    %vm1151 = vcmask 1046534
    %v1152 = vsel %vm1151, %v1136, %v1150
    %vm1153 = vcmask 1047559
    %v1154 = vsel %vm1153, %v1140, %v1152
    %vm1156 = vcmask 64512
    %v1157 = vsel %vm1156, %v1154, -inf
    %1158 = vmax.xlane.f32.xlu0 %v1157
    %v1159 = vpop.xlane.xlu0 %1158
    %v1160 = vmax.f32 %v1098, %v1159
    %v1161 = vsub.f32 %v1098, %v1160
    %v1162 = vmul.f32 %v1161, 1.442695
    %v1163 = vpow.pop %v1162
    %1165 = vset.pattern.permute.xlu0 0
    %1166 = vperm.xlu0 %1165, %v1160
    %v1167 = vpop.permute.xlu0 %1166
    %v1168 = vlaneseq
    %v1169 = vshrl.u32 %v1168, 7
    %v1170 = vsub.s32 0, %v1169
    %v1171 = vrot.slane %v1167, %v1170
    %v1172 = vlaneseq
    %v1173 = vshrl.u32 %v1172, 7
    %v1174 = vsub.s32 1, %v1173
    %v1175 = vrot.slane %v1167, %v1174
    %v1176 = vlaneseq
    %v1177 = vshrl.u32 %v1176, 7
    %v1178 = vsub.s32 2, %v1177
    %v1179 = vrot.slane %v1167, %v1178
    %v1180 = vlaneseq
    %v1181 = vshrl.u32 %v1180, 7
    %v1182 = vsub.s32 3, %v1181
    %v1183 = vrot.slane %v1167, %v1182
    %v1184 = vlaneseq
    %v1185 = vshrl.u32 %v1184, 7
    %v1186 = vsub.s32 4, %v1185
    %v1187 = vrot.slane %v1167, %v1186
    %v1188 = vlaneseq
    %v1189 = vshrl.u32 %v1188, 7
    %v1190 = vsub.s32 5, %v1189
    %v1191 = vrot.slane %v1167, %v1190
    %v1192 = vlaneseq
    %v1193 = vshrl.u32 %v1192, 7
    %v1194 = vsub.s32 6, %v1193
    %v1195 = vrot.slane %v1167, %v1194
    %v1196 = vlaneseq
    %v1197 = vshrl.u32 %v1196, 7
    %v1198 = vsub.s32 7, %v1197
    %v1199 = vrot.slane %v1167, %v1198
    %v1208 = vsub.f32 %v1090, %v1171
    %v1209 = vsub.f32 %v1091, %v1175
    %v1210 = vsub.f32 %v1092, %v1179
    %v1211 = vsub.f32 %v1093, %v1183
    %v1212 = vsub.f32 %v1094, %v1187
    %v1213 = vsub.f32 %v1095, %v1191
    %v1214 = vsub.f32 %v1096, %v1195
    %v1215 = vsub.f32 %v1097, %v1199
    %v1216 = vmul.f32 %v1208, 1.442695
    %v1217 = vpow.pop %v1216
    %v1218 = vmul.f32 %v1209, 1.442695
    %v1219 = vpow.pop %v1218
    %v1220 = vmul.f32 %v1210, 1.442695
    %v1221 = vpow.pop %v1220
    %v1222 = vmul.f32 %v1211, 1.442695
    %v1223 = vpow.pop %v1222
    %v1224 = vmul.f32 %v1212, 1.442695
    %v1225 = vpow.pop %v1224
    %v1226 = vmul.f32 %v1213, 1.442695
    %v1227 = vpow.pop %v1226
    %v1228 = vmul.f32 %v1214, 1.442695
    %v1229 = vpow.pop %v1228
    %v1230 = vmul.f32 %v1215, 1.442695
    %v1231 = vpow.pop %v1230
    %v1232 = vld [vmem:[#allocation4] sm:$0xff]
    %v1233 = vmul.f32 %v1163, %v1232
    %1242 = vset.pattern.permute.xlu0 0
    %1243 = vperm.xlu0 %1242, %v1217
    %v1244 = vpop.permute.xlu0 %1243
    %1245 = vset.pattern.permute.xlu0 0
    %1246 = vperm.xlu0 %1245, %v1219
    %v1247 = vpop.permute.xlu0 %1246
    %1248 = vset.pattern.permute.xlu0 0
    %1249 = vperm.xlu0 %1248, %v1221
    %v1250 = vpop.permute.xlu0 %1249
    %1251 = vset.pattern.permute.xlu0 0
    %1252 = vperm.xlu0 %1251, %v1223
    %v1253 = vpop.permute.xlu0 %1252
    %1254 = vset.pattern.permute.xlu0 0
    %1255 = vperm.xlu0 %1254, %v1225
    %v1256 = vpop.permute.xlu0 %1255
    %1257 = vset.pattern.permute.xlu0 0
    %1258 = vperm.xlu0 %1257, %v1227
    %v1259 = vpop.permute.xlu0 %1258
    %1260 = vset.pattern.permute.xlu0 0
    %1261 = vperm.xlu0 %1260, %v1229
    %v1262 = vpop.permute.xlu0 %1261
    %1263 = vset.pattern.permute.xlu0 0
    %1264 = vperm.xlu0 %1263, %v1231
    %v1265 = vpop.permute.xlu0 %1264
    %v1266 = vlaneseq
    %v1267 = vshrl.u32 %v1266, 7
    %v1268 = vsub.s32 %v1108, %v1267
    %v1269 = vrot.slane %v1244, %v1268
    %v1270 = vlaneseq
    %v1271 = vshrl.u32 %v1270, 7
    %v1272 = vsub.s32 %v1108, %v1271
    %v1273 = vrot.slane %v1247, %v1272
    %v1274 = vlaneseq
    %v1275 = vshrl.u32 %v1274, 7
    %v1276 = vsub.s32 %v1108, %v1275
    %v1277 = vrot.slane %v1250, %v1276
    %v1278 = vlaneseq
    %v1279 = vshrl.u32 %v1278, 7
    %v1280 = vsub.s32 %v1108, %v1279
    %v1281 = vrot.slane %v1253, %v1280
    %v1282 = vlaneseq
    %v1283 = vshrl.u32 %v1282, 7
    %v1284 = vsub.s32 %v1108, %v1283
    %v1285 = vrot.slane %v1256, %v1284
    %v1286 = vlaneseq
    %v1287 = vshrl.u32 %v1286, 7
    %v1288 = vsub.s32 %v1108, %v1287
    %v1289 = vrot.slane %v1259, %v1288
    %v1290 = vlaneseq
    %v1291 = vshrl.u32 %v1290, 7
    %v1292 = vsub.s32 %v1108, %v1291
    %v1293 = vrot.slane %v1262, %v1292
    %v1294 = vlaneseq
    %v1295 = vshrl.u32 %v1294, 7
    %v1296 = vsub.s32 %v1108, %v1295
    %v1297 = vrot.slane %v1265, %v1296
    %v1298 = vsel %vm1141, %v1273, %v1269
    %v1299 = vsel %vm1143, %v1277, %v1298
    %v1300 = vsel %vm1145, %v1281, %v1299
    %v1301 = vsel %vm1147, %v1285, %v1300
    %v1302 = vsel %vm1149, %v1289, %v1301
    %v1303 = vsel %vm1151, %v1293, %v1302
    %v1304 = vsel %vm1153, %v1297, %v1303
    %v1306 = vsel %vm1156, %v1304, 0.0
    %1307 = vadd.xlane.f32.xlu0 %v1306
    %v1308 = vpop.xlane.xlu0 %1307
    %v1309 = vadd.f32 %v1233, %v1308
    %vm1310 = vcmask 7168
    %1311 = vst.msk [vmem:[#allocation4] sm:$0xff] %vm1310, %v1309
    %v1312 = vld [vmem:[#allocation5] sm:$0xff]
    %v1313 = vld [vmem:[#allocation5 + $0x8] sm:$0xff]
    %v1314 = vld [vmem:[#allocation5 + $0x10] sm:$0xff]
    %v1315 = vld [vmem:[#allocation5 + $0x18] sm:$0xff]
    %1317 = vset.pattern.permute.xlu0 0
    %1318 = vperm.xlu0 %1317, %v1163
    %v1319 = vpop.permute.xlu0 %1318
    %v1321 = vmul.f32 %v1319, %v1312
    %v1322 = vmul.f32 %v1319, %v1313
    %v1323 = vmul.f32 %v1319, %v1314
    %v1324 = vmul.f32 %v1319, %v1315
    %v1325 = vld [vmem:[#allocation12] sm:$0xff]
    %v1326 = vld [vmem:[#allocation12 + $0x8] sm:$0xff]
    %v1327 = vld [vmem:[#allocation12 + $0x10] sm:$0xff]
    %v1328 = vld [vmem:[#allocation12 + $0x18] sm:$0xff]
    %v1329 = vld [vmem:[#allocation12 + $0x20] sm:$0xff]
    %v1330 = vld [vmem:[#allocation12 + $0x28] sm:$0xff]
    %v1331 = vld [vmem:[#allocation12 + $0x30] sm:$0xff]
    %v1332 = vld [vmem:[#allocation12 + $0x38] sm:$0xff]
    %v1333 = vld [vmem:[#allocation12 + $0x40] sm:$0xff]
    %v1334 = vld [vmem:[#allocation12 + $0x48] sm:$0xff]
    %v1335 = vld [vmem:[#allocation12 + $0x50] sm:$0xff]
    %v1336 = vld [vmem:[#allocation12 + $0x58] sm:$0xff]
    %v1337 = vld [vmem:[#allocation12 + $0x60] sm:$0xff]
    %v1338 = vld [vmem:[#allocation12 + $0x68] sm:$0xff]
    %v1339 = vld [vmem:[#allocation12 + $0x70] sm:$0xff]
    %v1340 = vld [vmem:[#allocation12 + $0x78] sm:$0xff]
    %v1341 = vld [vmem:[#allocation12 + $0x80] sm:$0xff]
    %v1342 = vld [vmem:[#allocation12 + $0x88] sm:$0xff]
    %v1343 = vld [vmem:[#allocation12 + $0x90] sm:$0xff]
    %v1344 = vld [vmem:[#allocation12 + $0x98] sm:$0xff]
    %v1345 = vld [vmem:[#allocation12 + $0xa0] sm:$0xff]
    %v1346 = vld [vmem:[#allocation12 + $0xa8] sm:$0xff]
    %v1347 = vld [vmem:[#allocation12 + $0xb0] sm:$0xff]
    %v1348 = vld [vmem:[#allocation12 + $0xb8] sm:$0xff]
    %v1349 = vld [vmem:[#allocation12 + $0xc0] sm:$0xff]
    %v1350 = vld [vmem:[#allocation12 + $0xc8] sm:$0xff]
    %v1351 = vld [vmem:[#allocation12 + $0xd0] sm:$0xff]
    %v1352 = vld [vmem:[#allocation12 + $0xd8] sm:$0xff]
    %v1353 = vld [vmem:[#allocation12 + $0xe0] sm:$0xff]
    %v1354 = vld [vmem:[#allocation12 + $0xe8] sm:$0xff]
    %v1355 = vld [vmem:[#allocation12 + $0xf0] sm:$0xff]
    %v1356 = vld [vmem:[#allocation12 + $0xf8] sm:$0xff]
    %v1365 = vmul.f32 %v1244, %v1325
    %v1366 = vmul.f32 %v1244, %v1326
    %v1367 = vmul.f32 %v1244, %v1327
    %v1368 = vmul.f32 %v1244, %v1328
    %v1369 = vmul.f32 %v1247, %v1329
    %v1370 = vmul.f32 %v1247, %v1330
    %v1371 = vmul.f32 %v1247, %v1331
    %v1372 = vmul.f32 %v1247, %v1332
    %v1373 = vmul.f32 %v1250, %v1333
    %v1374 = vmul.f32 %v1250, %v1334
    %v1375 = vmul.f32 %v1250, %v1335
    %v1376 = vmul.f32 %v1250, %v1336
    %v1377 = vmul.f32 %v1253, %v1337
    %v1378 = vmul.f32 %v1253, %v1338
    %v1379 = vmul.f32 %v1253, %v1339
    %v1380 = vmul.f32 %v1253, %v1340
    %v1381 = vmul.f32 %v1256, %v1341
    %v1382 = vmul.f32 %v1256, %v1342
    %v1383 = vmul.f32 %v1256, %v1343
    %v1384 = vmul.f32 %v1256, %v1344
    %v1385 = vmul.f32 %v1259, %v1345
    %v1386 = vmul.f32 %v1259, %v1346
    %v1387 = vmul.f32 %v1259, %v1347
    %v1388 = vmul.f32 %v1259, %v1348
    %v1389 = vmul.f32 %v1262, %v1349
    %v1390 = vmul.f32 %v1262, %v1350
    %v1391 = vmul.f32 %v1262, %v1351
    %v1392 = vmul.f32 %v1262, %v1352
    %v1393 = vmul.f32 %v1265, %v1353
    %v1394 = vmul.f32 %v1265, %v1354
    %v1395 = vmul.f32 %v1265, %v1355
    %v1396 = vmul.f32 %v1265, %v1356
    %v1397 = vrot.slane %v1365, 4
    %v1398 = vadd.f32 %v1365, %v1397
    %v1399 = vrot.slane %v1398, 2
    %v1400 = vadd.f32 %v1398, %v1399
    %v1401 = vrot.slane %v1400, 1
    %v1402 = vadd.f32 %v1400, %v1401
    %v1403 = vrot.slane %v1366, 4
    %v1404 = vadd.f32 %v1366, %v1403
    %v1405 = vrot.slane %v1404, 2
    %v1406 = vadd.f32 %v1404, %v1405
    %v1407 = vrot.slane %v1406, 1
    %v1408 = vadd.f32 %v1406, %v1407
    %v1409 = vrot.slane %v1367, 4
    %v1410 = vadd.f32 %v1367, %v1409
    %v1411 = vrot.slane %v1410, 2
    %v1412 = vadd.f32 %v1410, %v1411
    %v1413 = vrot.slane %v1412, 1
    %v1414 = vadd.f32 %v1412, %v1413
    %v1415 = vrot.slane %v1368, 4
    %v1416 = vadd.f32 %v1368, %v1415
    %v1417 = vrot.slane %v1416, 2
    %v1418 = vadd.f32 %v1416, %v1417
    %v1419 = vrot.slane %v1418, 1
    %v1420 = vadd.f32 %v1418, %v1419
    %v1421 = vrot.slane %v1369, 4
    %v1422 = vadd.f32 %v1369, %v1421
    %v1423 = vrot.slane %v1422, 2
    %v1424 = vadd.f32 %v1422, %v1423
    %v1425 = vrot.slane %v1424, 1
    %v1426 = vadd.f32 %v1424, %v1425
    %v1427 = vrot.slane %v1370, 4
    %v1428 = vadd.f32 %v1370, %v1427
    %v1429 = vrot.slane %v1428, 2
    %v1430 = vadd.f32 %v1428, %v1429
    %v1431 = vrot.slane %v1430, 1
    %v1432 = vadd.f32 %v1430, %v1431
    %v1433 = vrot.slane %v1371, 4
    %v1434 = vadd.f32 %v1371, %v1433
    %v1435 = vrot.slane %v1434, 2
    %v1436 = vadd.f32 %v1434, %v1435
    %v1437 = vrot.slane %v1436, 1
    %v1438 = vadd.f32 %v1436, %v1437
    %v1439 = vrot.slane %v1372, 4
    %v1440 = vadd.f32 %v1372, %v1439
    %v1441 = vrot.slane %v1440, 2
    %v1442 = vadd.f32 %v1440, %v1441
    %v1443 = vrot.slane %v1442, 1
    %v1444 = vadd.f32 %v1442, %v1443
    %v1445 = vrot.slane %v1373, 4
    %v1446 = vadd.f32 %v1373, %v1445
    %v1447 = vrot.slane %v1446, 2
    %v1448 = vadd.f32 %v1446, %v1447
    %v1449 = vrot.slane %v1448, 1
    %v1450 = vadd.f32 %v1448, %v1449
    %v1451 = vrot.slane %v1374, 4
    %v1452 = vadd.f32 %v1374, %v1451
    %v1453 = vrot.slane %v1452, 2
    %v1454 = vadd.f32 %v1452, %v1453
    %v1455 = vrot.slane %v1454, 1
    %v1456 = vadd.f32 %v1454, %v1455
    %v1457 = vrot.slane %v1375, 4
    %v1458 = vadd.f32 %v1375, %v1457
    %v1459 = vrot.slane %v1458, 2
    %v1460 = vadd.f32 %v1458, %v1459
    %v1461 = vrot.slane %v1460, 1
    %v1462 = vadd.f32 %v1460, %v1461
    %v1463 = vrot.slane %v1376, 4
    %v1464 = vadd.f32 %v1376, %v1463
    %v1465 = vrot.slane %v1464, 2
    %v1466 = vadd.f32 %v1464, %v1465
    %v1467 = vrot.slane %v1466, 1
    %v1468 = vadd.f32 %v1466, %v1467
    %v1469 = vrot.slane %v1377, 4
    %v1470 = vadd.f32 %v1377, %v1469
    %v1471 = vrot.slane %v1470, 2
    %v1472 = vadd.f32 %v1470, %v1471
    %v1473 = vrot.slane %v1472, 1
    %v1474 = vadd.f32 %v1472, %v1473
    %v1475 = vrot.slane %v1378, 4
    %v1476 = vadd.f32 %v1378, %v1475
    %v1477 = vrot.slane %v1476, 2
    %v1478 = vadd.f32 %v1476, %v1477
    %v1479 = vrot.slane %v1478, 1
    %v1480 = vadd.f32 %v1478, %v1479
    %v1481 = vrot.slane %v1379, 4
    %v1482 = vadd.f32 %v1379, %v1481
    %v1483 = vrot.slane %v1482, 2
    %v1484 = vadd.f32 %v1482, %v1483
    %v1485 = vrot.slane %v1484, 1
    %v1486 = vadd.f32 %v1484, %v1485
    %v1487 = vrot.slane %v1380, 4
    %v1488 = vadd.f32 %v1380, %v1487
    %v1489 = vrot.slane %v1488, 2
    %v1490 = vadd.f32 %v1488, %v1489
    %v1491 = vrot.slane %v1490, 1
    %v1492 = vadd.f32 %v1490, %v1491
    %v1493 = vrot.slane %v1381, 4
    %v1494 = vadd.f32 %v1381, %v1493
    %v1495 = vrot.slane %v1494, 2
    %v1496 = vadd.f32 %v1494, %v1495
    %v1497 = vrot.slane %v1496, 1
    %v1498 = vadd.f32 %v1496, %v1497
    %v1499 = vrot.slane %v1382, 4
    %v1500 = vadd.f32 %v1382, %v1499
    %v1501 = vrot.slane %v1500, 2
    %v1502 = vadd.f32 %v1500, %v1501
    %v1503 = vrot.slane %v1502, 1
    %v1504 = vadd.f32 %v1502, %v1503
    %v1505 = vrot.slane %v1383, 4
    %v1506 = vadd.f32 %v1383, %v1505
    %v1507 = vrot.slane %v1506, 2
    %v1508 = vadd.f32 %v1506, %v1507
    %v1509 = vrot.slane %v1508, 1
    %v1510 = vadd.f32 %v1508, %v1509
    %v1511 = vrot.slane %v1384, 4
    %v1512 = vadd.f32 %v1384, %v1511
    %v1513 = vrot.slane %v1512, 2
    %v1514 = vadd.f32 %v1512, %v1513
    %v1515 = vrot.slane %v1514, 1
    %v1516 = vadd.f32 %v1514, %v1515
    %v1517 = vrot.slane %v1385, 4
    %v1518 = vadd.f32 %v1385, %v1517
    %v1519 = vrot.slane %v1518, 2
    %v1520 = vadd.f32 %v1518, %v1519
    %v1521 = vrot.slane %v1520, 1
    %v1522 = vadd.f32 %v1520, %v1521
    %v1523 = vrot.slane %v1386, 4
    %v1524 = vadd.f32 %v1386, %v1523
    %v1525 = vrot.slane %v1524, 2
    %v1526 = vadd.f32 %v1524, %v1525
    %v1527 = vrot.slane %v1526, 1
    %v1528 = vadd.f32 %v1526, %v1527
    %v1529 = vrot.slane %v1387, 4
    %v1530 = vadd.f32 %v1387, %v1529
    %v1531 = vrot.slane %v1530, 2
    %v1532 = vadd.f32 %v1530, %v1531
    %v1533 = vrot.slane %v1532, 1
    %v1534 = vadd.f32 %v1532, %v1533
    %v1535 = vrot.slane %v1388, 4
    %v1536 = vadd.f32 %v1388, %v1535
    %v1537 = vrot.slane %v1536, 2
    %v1538 = vadd.f32 %v1536, %v1537
    %v1539 = vrot.slane %v1538, 1
    %v1540 = vadd.f32 %v1538, %v1539
    %v1541 = vrot.slane %v1389, 4
    %v1542 = vadd.f32 %v1389, %v1541
    %v1543 = vrot.slane %v1542, 2
    %v1544 = vadd.f32 %v1542, %v1543
    %v1545 = vrot.slane %v1544, 1
    %v1546 = vadd.f32 %v1544, %v1545
    %v1547 = vrot.slane %v1390, 4
    %v1548 = vadd.f32 %v1390, %v1547
    %v1549 = vrot.slane %v1548, 2
    %v1550 = vadd.f32 %v1548, %v1549
    %v1551 = vrot.slane %v1550, 1
    %v1552 = vadd.f32 %v1550, %v1551
    %v1553 = vrot.slane %v1391, 4
    %v1554 = vadd.f32 %v1391, %v1553
    %v1555 = vrot.slane %v1554, 2
    %v1556 = vadd.f32 %v1554, %v1555
    %v1557 = vrot.slane %v1556, 1
    %v1558 = vadd.f32 %v1556, %v1557
    %v1559 = vrot.slane %v1392, 4
    %v1560 = vadd.f32 %v1392, %v1559
    %v1561 = vrot.slane %v1560, 2
    %v1562 = vadd.f32 %v1560, %v1561
    %v1563 = vrot.slane %v1562, 1
    %v1564 = vadd.f32 %v1562, %v1563
    %v1565 = vrot.slane %v1393, 4
    %v1566 = vadd.f32 %v1393, %v1565
    %v1567 = vrot.slane %v1566, 2
    %v1568 = vadd.f32 %v1566, %v1567
    %v1569 = vrot.slane %v1568, 1
    %v1570 = vadd.f32 %v1568, %v1569
    %v1571 = vrot.slane %v1394, 4
    %v1572 = vadd.f32 %v1394, %v1571
    %v1573 = vrot.slane %v1572, 2
    %v1574 = vadd.f32 %v1572, %v1573
    %v1575 = vrot.slane %v1574, 1
    %v1576 = vadd.f32 %v1574, %v1575
    %v1577 = vrot.slane %v1395, 4
    %v1578 = vadd.f32 %v1395, %v1577
    %v1579 = vrot.slane %v1578, 2
    %v1580 = vadd.f32 %v1578, %v1579
    %v1581 = vrot.slane %v1580, 1
    %v1582 = vadd.f32 %v1580, %v1581
    %v1583 = vrot.slane %v1396, 4
    %v1584 = vadd.f32 %v1396, %v1583
    %v1585 = vrot.slane %v1584, 2
    %v1586 = vadd.f32 %v1584, %v1585
    %v1587 = vrot.slane %v1586, 1
    %v1588 = vadd.f32 %v1586, %v1587
    %v1621 = vsel %vm1141, %v1426, %v1402
    %v1622 = vsel %vm1143, %v1450, %v1621
    %v1623 = vsel %vm1145, %v1474, %v1622
    %v1624 = vsel %vm1147, %v1498, %v1623
    %v1625 = vsel %vm1149, %v1522, %v1624
    %v1626 = vsel %vm1151, %v1546, %v1625
    %v1627 = vsel %vm1153, %v1570, %v1626
    %v1628 = vsel %vm1141, %v1432, %v1408
    %v1629 = vsel %vm1143, %v1456, %v1628
    %v1630 = vsel %vm1145, %v1480, %v1629
    %v1631 = vsel %vm1147, %v1504, %v1630
    %v1632 = vsel %vm1149, %v1528, %v1631
    %v1633 = vsel %vm1151, %v1552, %v1632
    %v1634 = vsel %vm1153, %v1576, %v1633
    %v1635 = vsel %vm1141, %v1438, %v1414
    %v1636 = vsel %vm1143, %v1462, %v1635
    %v1637 = vsel %vm1145, %v1486, %v1636
    %v1638 = vsel %vm1147, %v1510, %v1637
    %v1639 = vsel %vm1149, %v1534, %v1638
    %v1640 = vsel %vm1151, %v1558, %v1639
    %v1641 = vsel %vm1153, %v1582, %v1640
    %v1642 = vsel %vm1141, %v1444, %v1420
    %v1643 = vsel %vm1143, %v1468, %v1642
    %v1644 = vsel %vm1145, %v1492, %v1643
    %v1645 = vsel %vm1147, %v1516, %v1644
    %v1646 = vsel %vm1149, %v1540, %v1645
    %v1647 = vsel %vm1151, %v1564, %v1646
    %v1648 = vsel %vm1153, %v1588, %v1647
    %v1653 = vadd.f32 %v1321, %v1627
    %v1654 = vadd.f32 %v1322, %v1634
    %v1655 = vadd.f32 %v1323, %v1641
    %v1656 = vadd.f32 %v1324, %v1648
    %1657 = vst [vmem:[#allocation5] sm:$0xff] %v1653
    %1658 = vst [vmem:[#allocation5 + $0x8] sm:$0xff] %v1654
    %1659 = vst [vmem:[#allocation5 + $0x10] sm:$0xff] %v1655
    %1660 = vst [vmem:[#allocation5 + $0x18] sm:$0xff] %v1656
    %1661 = vst.msk [vmem:[#allocation3] sm:$0xff] %vm1310, %v1160
    // Predicated region
    $region50: #{tpu_custom_call.1} parent=1 // pred_check
      %p1662 = pneg %p81
    $region51: #{tpu_custom_call.1} parent=1 // pred_check_branch
      %1664 = sbr.rel (%p1662) target = $region53
    $region52: #{tpu_custom_call.1} parent=1 // pred_region
      %v1665 = vld [vmem:[#allocation5] sm:$0xff]
      %v1666 = vld [vmem:[#allocation5 + $0x8] sm:$0xff]
      %v1667 = vld [vmem:[#allocation5 + $0x10] sm:$0xff]
      %v1668 = vld [vmem:[#allocation5 + $0x18] sm:$0xff]
      %v1669 = vld [vmem:[#allocation4] sm:$0xff]
      %1671 = vset.pattern.permute.xlu0 0
      %1672 = vperm.xlu0 %1671, %v1669
      %v1673 = vpop.permute.xlu0 %1672
      %v1675 = vrcp.pop %v1673
      %v1676 = vmul.f32 %v1665, %v1675
      %v1677 = vmul.f32 %v1666, %v1675
      %v1678 = vmul.f32 %v1667, %v1675
      %v1679 = vmul.f32 %v1668, %v1675
      %1680 = vst [vmem:[#allocation15] sm:$0xff] %v1676
      %1681 = vst [vmem:[#allocation15 + $0x8] sm:$0xff] %v1677
      %1682 = vst [vmem:[#allocation15 + $0x10] sm:$0xff] %v1678
      %1683 = vst [vmem:[#allocation15 + $0x18] sm:$0xff] %v1679
    $region53: #{tpu_custom_call.1} parent=1 // pred_fallthru
      _
    // Predicated region
    $region54: #{tpu_custom_call.1} parent=1 // pred_check
      _
    $region55: #{tpu_custom_call.1} parent=1 // pred_check_branch
      %1685 = sbr.rel (0) target = $region57
    $region56: #{tpu_custom_call.1} parent=1 // pred_region
      %s1687 = ssub.s32 512, 512
      %1688 = vsyncadd [#allocation9], %s1687
      %s1690 = sshll.u32 [#allocation15], 4
      %s1691 = int_to_ptr.vmem [resolvable:$true] %s1690
      %1693 = dma.vmem_to_hbm [thread:$0]  %s1691, 512, %s7, [#allocation9]
    $region57: #{tpu_custom_call.1} parent=1 // pred_fallthru
      _
    // Predicated region
    $region58: #{tpu_custom_call.1} parent=1 // pred_check
      _
    $region59: #{tpu_custom_call.1} parent=1 // pred_check_branch
      %1695 = sbr.rel (0) target = $region61
    $region60: #{tpu_custom_call.1} parent=1 // pred_region
      %1696 = dma.done [#allocation9], 512
    $region61: #{tpu_custom_call.1} parent=1 // pred_fallthru
      _
    %1697 = vsyncpa [#allocation8], 1
    %1698 = vsyncpa [#allocation11], 1
    %1699 = vsyncpa [#allocation14], 1
    %1700 = vsyncpa [#allocation9], 1

</llo_original>
